<compile_context>
chip_gen: v7x
topology: tpu7x:2x2x1
jax: 0.10.0
libtpu: 0.0.40
codegen_flags: <defaults>
</compile_context>

<pallas_src>
import functools

import jax
import jax.numpy as jnp
from jax.experimental import pallas as pl
from jax.experimental.pallas import tpu as pltpu


def _round_up(n, m):
    return ((n + m - 1) // m) * m


# --------------------------------------------------------------------------- #
# Kernel
# --------------------------------------------------------------------------- #
def _self_attn_kernel(x_ref, wqkv_ref, bqkv_ref, out_ref, attn_ref=None, *,
                      seq_len, feature_size, lane_stride, mxu_dtype):
    S, F = seq_len, feature_size
    rows = x_ref.shape[0]          # batch_block * S
    Bb = rows // S

    x2 = x_ref[...]                # (Bb*S, F), mxu_dtype
    w = wqkv_ref[...]              # (F, 3*lane_stride), mxu_dtype
    b = bqkv_ref[...]              # (1, 3*lane_stride), f32

    # ---- Fused QKV projection: one wide MXU matmul over Bb*S rows ----------
    qkv = jnp.dot(x2, w, preferred_element_type=jnp.float32) + b   # f32

    def proj(idx):
        off = idx * lane_stride                      # 128-aligned slice start
        return qkv[:, off:off + F].reshape(Bb, S, F)

    q, k, v = proj(0), proj(1), proj(2)

    # ---- Scaled dot-product scores: Q @ K^T / sqrt(F) ----------------------
    # Transposed contraction — K is consumed directly by the MXU.
    scale = jnp.float32(1.0 / float(F) ** 0.5)
    scores = jnp.einsum("bqf,bkf->bqk",
                        q.astype(mxu_dtype), k.astype(mxu_dtype),
                        preferred_element_type=jnp.float32) * scale  # (Bb,S,S)

    # ---- Numerically-stable softmax (f32) -----------------------------------
    m = jnp.max(scores, axis=-1, keepdims=True)
    e = jnp.exp(scores - m)
    denom = jnp.sum(e, axis=-1, keepdims=True)
    inv = pl.reciprocal(denom, approx=True)          # EUP vrcp (off the VALU)
    inv = inv * (2.0 - denom * inv)                  # one Newton step -> f32-exact rows
    attn = e * inv                                   # (Bb, S, S)

    # ---- Attention output: attn @ V -----------------------------------------
    out = jnp.einsum("bqk,bkf->bqf",
                     attn.astype(mxu_dtype), v.astype(mxu_dtype),
                     preferred_element_type=jnp.float32)             # (Bb,S,F)

    # ---- Stores (lane-dense slabs when the output refs are 2-D) -------------
    if len(out_ref.shape) == 2:
        out_ref[...] = out.reshape(Bb, S * F).astype(out_ref.dtype)
    else:
        out_ref[...] = out.astype(out_ref.dtype)
    if attn_ref is not None:
        if len(attn_ref.shape) == 2:
            attn_ref[...] = attn.reshape(Bb, S * S).astype(attn_ref.dtype)
        else:
            attn_ref[...] = attn.astype(attn_ref.dtype)
    # TODO(synk): optional `mask` argument (forward default mask=None) not implemented.
    # TODO(synk): for large S, switch to a KV-tiled online-softmax (flash-style)
    # variant; full (S,S) attn materialization is fine only at small S.


# --------------------------------------------------------------------------- #
# Parameter fusion / packing
# --------------------------------------------------------------------------- #
def fuse_qkv_params(params, dtype=jnp.float32):
    """Fuse Q/K/V weights into one (F, 3*stride) matrix with each projection in
    its own 128-lane-aligned column band. Returns (W_fused, b_fused, stride)."""
    F = params["wq_t"].shape[0]
    stride = _round_up(F, 128)

    def pad_w(w):
        return w if stride == F else jnp.pad(w, ((0, 0), (0, stride - F)))

    def pad_b(b):
        return b if stride == F else jnp.pad(b, ((0, 0), (0, stride - F)))

    w_qkv = jnp.concatenate(
        [pad_w(params["wq_t"]), pad_w(params["wk_t"]), pad_w(params["wv_t"])],
        axis=1).astype(dtype)                        # (F, 3*stride)
    b_qkv = jnp.concatenate(
        [pad_b(params["bq"]), pad_b(params["bk"]), pad_b(params["bv"])],
        axis=1).astype(jnp.float32)                  # (1, 3*stride)
    return w_qkv, b_qkv, stride


def _choose_batch_block(B, S, F, x_itemsize, return_attention):
    """Pick a batch block: ~1 MiB per block, >=2 (ideally >=4) grid steps when
    possible, second-to-last block dims sublane-friendly (multiple of 8 or full)."""
    row_bytes = S * F * (x_itemsize + 4)
    if return_attention:
        row_bytes += S * S * 4
    cands = [d for d in range(1, B + 1)
             if B % d == 0 and (d == B or d % 8 == 0)]
    target = 1 << 20
    best = None
    for d in cands:
        steps = B // d
        penalty = abs(d * row_bytes - target)
        if steps < 2:
            penalty += 1 << 22          # leaves a v7x TensorCore idle
        elif steps < 4:
            penalty += 1 << 20          # weak DMA/compute overlap
        if best is None or penalty < best[0]:
            best = (penalty, d)
    return best[1]


# --------------------------------------------------------------------------- #
# Wrapper
# --------------------------------------------------------------------------- #
def self_attention_layer(x, params, *, batch_block=None,
                         mxu_dtype=jnp.float32, return_attention=True):
    """x: (B, S, F) float32. Returns (output (B,S,F), attention_weights (B,S,S))
    matching the PyTorch forward with mask=None (attn is None if disabled)."""
    B, S, F = x.shape
    itemsize = jnp.dtype(mxu_dtype).itemsize
    if batch_block is None:
        batch_block = _choose_batch_block(B, S, F, itemsize, return_attention)
    assert B % batch_block == 0, "batch must be divisible by batch_block"
    grid = (B // batch_block,)

    w_qkv, b_qkv, lane_stride = fuse_qkv_params(params, dtype=mxu_dtype)
    x2d = x.reshape(B * S, F).astype(mxu_dtype)      # free wrapper-level flatten

    kernel = functools.partial(
        _self_attn_kernel, seq_len=S, feature_size=F,
        lane_stride=lane_stride, mxu_dtype=mxu_dtype)

    # VMEM budget: double-buffered activation blocks + single-buffered weights.
    act_bytes = batch_block * S * F * (itemsize + 4)
    if return_attention:
        act_bytes += batch_block * S * S * 4
    w_bytes = F * 3 * lane_stride * itemsize + 3 * lane_stride * 4
    need = 2 * act_bytes + w_bytes
    vmem_limit = int(min(max(4 * need + (2 << 20), 32 << 20), 48 << 20))

    def _run(lane_dense, single_buffer_weights):
        wkw = {}
        if single_buffer_weights and hasattr(pl, "Buffered"):
            wkw = dict(pipeline_mode=pl.Buffered(1))
        try:
            w_spec = pl.BlockSpec((F, 3 * lane_stride), lambda g: (0, 0), **wkw)
            b_spec = pl.BlockSpec((1, 3 * lane_stride), lambda g: (0, 0), **wkw)
        except TypeError:  # BlockSpec without pipeline_mode support
            w_spec = pl.BlockSpec((F, 3 * lane_stride), lambda g: (0, 0))
            b_spec = pl.BlockSpec((1, 3 * lane_stride), lambda g: (0, 0))

        in_specs = [
            pl.BlockSpec((batch_block * S, F), lambda g: (g, 0)),   # x slab
            w_spec,
            b_spec,
        ]
        if lane_dense:
            out_shapes = [jax.ShapeDtypeStruct((B, S * F), jnp.float32)]
            out_specs = [pl.BlockSpec((batch_block, S * F), lambda g: (g, 0))]
            if return_attention:
                out_shapes.append(jax.ShapeDtypeStruct((B, S * S), jnp.float32))
                out_specs.append(pl.BlockSpec((batch_block, S * S), lambda g: (g, 0)))
        else:
            out_shapes = [jax.ShapeDtypeStruct((B, S, F), jnp.float32)]
            out_specs = [pl.BlockSpec((batch_block, S, F), lambda g: (g, 0, 0))]
            if return_attention:
                out_shapes.append(jax.ShapeDtypeStruct((B, S, S), jnp.float32))
                out_specs.append(pl.BlockSpec((batch_block, S, S), lambda g: (g, 0, 0)))

        return pl.pallas_call(
            kernel,
            out_shape=tuple(out_shapes),
            grid=grid,
            in_specs=in_specs,
            out_specs=tuple(out_specs),
            compiler_params=pltpu.CompilerParams(
                dimension_semantics=("parallel",),
                vmem_limit_bytes=vmem_limit),
        )(x2d, w_qkv, b_qkv)

    try:
        results = _run(lane_dense=True, single_buffer_weights=True)
    except Exception:
        # TODO(synk): fallback for Mosaic builds that reject the lane-merge
        # relayout on store or pl.Buffered(1); keeps sub-128-lane masked stores.
        results = _run(lane_dense=False, single_buffer_weights=False)

    out = results[0].reshape(B, S, F)
    if return_attention:
        return out, results[1].reshape(B, S, S)
    return out, None


# --------------------------------------------------------------------------- #
# Reference + test harness
# --------------------------------------------------------------------------- #
def init_params(key, feature_size):
    """Synthetic init (nn.Linear shapes; we store transposed weights (in,out))."""
    ks = jax.random.split(key, 6)
    bound = 1.0 / float(feature_size) ** 0.5

    def w(k):
        return jax.random.uniform(k, (feature_size, feature_size),
                                  jnp.float32, -bound, bound)

    def b(k):
        return jax.random.uniform(k, (1, feature_size),
                                  jnp.float32, -bound, bound)

    return {
        "wk_t": w(ks[0]), "bk": b(ks[1]),
        "wq_t": w(ks[2]), "bq": b(ks[3]),
        "wv_t": w(ks[4]), "bv": b(ks[5]),
    }


def _reference(x, params):
    """Pure-JAX reference of the PyTorch forward (mask=None)."""
    q = x @ params["wq_t"] + params["bq"]
    k = x @ params["wk_t"] + params["bk"]
    v = x @ params["wv_t"] + params["bv"]
    F = x.shape[-1]
    scores = jnp.einsum("bqf,bkf->bqk", q, k) / jnp.sqrt(jnp.float32(F))
    attn = jax.nn.softmax(scores, axis=-1)
    out = jnp.einsum("bqk,bkf->bqf", attn, v)
    return out, attn


if __name__ == "__main__":
    B, S, F = 2, 8, 32   # batch, seq, feature_size
    key = jax.random.PRNGKey(0)
    kx, kp = jax.random.split(key)
    x = jax.random.normal(kx, (B, S, F), jnp.float32)
    params = init_params(kp, F)

    ref_out, ref_attn = _reference(x, params)

    # 1) Full-precision path (PyTorch-parity numerics).
    out, attn = self_attention_layer(x, params, mxu_dtype=jnp.float32)
    out = jax.block_until_ready(out)
    attn = jax.block_until_ready(attn)
    assert jnp.allclose(out, ref_out, atol=1e-3, rtol=1e-3)
    assert jnp.allclose(attn, ref_attn, atol=1e-3, rtol=1e-3)

    # 2) bf16-MXU path (v6e/v7x perf config): matmul operands bf16, softmax and
    #    accumulation f32.  Wider tolerance for bf16 operand rounding.
    out_bf, attn_bf = self_attention_layer(x, params, mxu_dtype=jnp.bfloat16)
    out_bf = jax.block_until_ready(out_bf)
    attn_bf = jax.block_until_ready(attn_bf)
    assert jnp.allclose(out_bf, ref_out, atol=5e-2, rtol=5e-2)
    assert jnp.allclose(attn_bf, ref_attn, atol=5e-2, rtol=5e-2)

    print("KERNEL_OK")
</pallas_src>

<mosaic_0001>
module attributes {stable_mosaic.version = 11 : i64} {
  func.func @_self_attn_kernel(%arg0: i32, %arg1: memref<16x32xf32, #tpu.memory_space<vmem>>, %arg2: memref<32x384xf32, #tpu.memory_space<vmem>>, %arg3: memref<1x384xf32, #tpu.memory_space<vmem>>, %arg4: memref<2x256xf32, #tpu.memory_space<vmem>>, %arg5: memref<2x64xf32, #tpu.memory_space<vmem>>) attributes {dimension_semantics = [#tpu.dimension_semantics<parallel>], iteration_bounds = array<i64: 1>, scalar_prefetch = 0 : i64, scratch_operands = 0 : i64, tpu.core_type = #tpu.core_type<tc>, window_params = [{transform_indices = @transform_0, window_bounds = array<i64: 16, 32>}, {pipeline_mode = #tpu.pipeline_mode<synchronous>, transform_indices = @transform_1, window_bounds = array<i64: 32, 384>}, {pipeline_mode = #tpu.pipeline_mode<synchronous>, transform_indices = @transform_2, window_bounds = array<i64: 1, 384>}, {transform_indices = @transform_3, window_bounds = array<i64: 2, 256>}, {transform_indices = @transform_4, window_bounds = array<i64: 2, 64>}]} {
    %c0 = arith.constant 0 : index
    %c0_0 = arith.constant 0 : index
    %0 = vector.load %arg1[%c0, %c0_0] : memref<16x32xf32, #tpu.memory_space<vmem>>, vector<16x32xf32>
    %c0_1 = arith.constant 0 : index
    %c0_2 = arith.constant 0 : index
    %1 = vector.load %arg2[%c0_1, %c0_2] : memref<32x384xf32, #tpu.memory_space<vmem>>, vector<32x384xf32>
    %c0_3 = arith.constant 0 : index
    %c0_4 = arith.constant 0 : index
    %2 = vector.load %arg3[%c0_3, %c0_4] : memref<1x384xf32, #tpu.memory_space<vmem>>, vector<1x384xf32>
    %cst = arith.constant dense<0.000000e+00> : vector<16x384xf32>
    %3 = tpu.matmul %0, %1, %cst {dimension_numbers = #tpu.dot_dimension_numbers<[1], [0], [0], [1], [0, 0, 1, 1], [], []>} : vector<16x32xf32>, vector<32x384xf32>, vector<16x384xf32> -> vector<16x384xf32>
    %4 = vector.broadcast %2 : vector<1x384xf32> to vector<16x384xf32>
    %5 = arith.addf %3, %4 : vector<16x384xf32>
    %6 = vector.extract_strided_slice %5 {offsets = [0, 0], sizes = [16, 32], strides = [1, 1]} : vector<16x384xf32> to vector<16x32xf32>
    %7 = vector.shape_cast %6 : vector<16x32xf32> to vector<2x8x32xf32>
    %8 = vector.extract_strided_slice %5 {offsets = [0, 128], sizes = [16, 32], strides = [1, 1]} : vector<16x384xf32> to vector<16x32xf32>
    %9 = vector.shape_cast %8 : vector<16x32xf32> to vector<2x8x32xf32>
    %10 = vector.extract_strided_slice %5 {offsets = [0, 256], sizes = [16, 32], strides = [1, 1]} : vector<16x384xf32> to vector<16x32xf32>
    %11 = vector.shape_cast %10 : vector<16x32xf32> to vector<2x8x32xf32>
    "tpu.trace_start"() <{level = 10 : i32, message = "bqf,bkf->bqk"}> : () -> ()
    %cst_5 = arith.constant dense<0.000000e+00> : vector<2x8x8xf32>
    %12 = tpu.matmul %7, %9, %cst_5 {dimension_numbers = #tpu.dot_dimension_numbers<[2], [2], [1], [1], [0, 0, 0, 1, 1, 1], [0], [0]>} : vector<2x8x32xf32>, vector<2x8x32xf32>, vector<2x8x8xf32> -> vector<2x8x8xf32>
    "tpu.trace_stop"() : () -> ()
    %cst_6 = arith.constant 0.176776692 : f32
    %13 = vector.broadcast %cst_6 : f32 to vector<2x8x8xf32>
    %14 = arith.mulf %12, %13 : vector<2x8x8xf32>
    %cst_7 = arith.constant dense<0xFF800000> : vector<2x8xf32>
    %15 = vector.multi_reduction <maximumf>, %14, %cst_7 [2] : vector<2x8x8xf32> to vector<2x8xf32>
    %16 = vector.shape_cast %15 : vector<2x8xf32> to vector<2x8x1xf32>
    %17 = vector.broadcast %16 : vector<2x8x1xf32> to vector<2x8x8xf32>
    %18 = arith.subf %14, %17 : vector<2x8x8xf32>
    %19 = math.exp %18 : vector<2x8x8xf32>
    %cst_8 = arith.constant dense<0.000000e+00> : vector<2x8xf32>
    %20 = vector.multi_reduction <add>, %19, %cst_8 [2] : vector<2x8x8xf32> to vector<2x8xf32>
    %21 = vector.shape_cast %20 : vector<2x8xf32> to vector<2x8x1xf32>
    %22 = tpu.reciprocal %21 {approx = true} : vector<2x8x1xf32> -> vector<2x8x1xf32>
    %23 = arith.mulf %21, %22 : vector<2x8x1xf32>
    %cst_9 = arith.constant 2.000000e+00 : f32
    %24 = vector.broadcast %cst_9 : f32 to vector<2x8x1xf32>
    %25 = arith.subf %24, %23 : vector<2x8x1xf32>
    %26 = arith.mulf %22, %25 : vector<2x8x1xf32>
    %27 = vector.broadcast %26 : vector<2x8x1xf32> to vector<2x8x8xf32>
    %28 = arith.mulf %19, %27 : vector<2x8x8xf32>
    "tpu.trace_start"() <{level = 10 : i32, message = "bqk,bkf->bqf"}> : () -> ()
    %cst_10 = arith.constant dense<0.000000e+00> : vector<2x8x32xf32>
    %29 = tpu.matmul %28, %11, %cst_10 {dimension_numbers = #tpu.dot_dimension_numbers<[2], [1], [1], [2], [0, 0, 0, 1, 1, 2], [0], [0]>} : vector<2x8x8xf32>, vector<2x8x32xf32>, vector<2x8x32xf32> -> vector<2x8x32xf32>
    "tpu.trace_stop"() : () -> ()
    %30 = vector.shape_cast %29 : vector<2x8x32xf32> to vector<2x256xf32>
    %c0_11 = arith.constant 0 : index
    %c0_12 = arith.constant 0 : index
    %31 = vector.load %arg4[%c0_11, %c0_12] : memref<2x256xf32, #tpu.memory_space<vmem>>, vector<2x256xf32>
    tpu.vector_store %arg4[%c0_11, %c0_12], %30 {strides = array<i32>} : memref<2x256xf32, #tpu.memory_space<vmem>>, vector<2x256xf32>,
    %32 = vector.shape_cast %28 : vector<2x8x8xf32> to vector<2x64xf32>
    %c0_13 = arith.constant 0 : index
    %c0_14 = arith.constant 0 : index
    %33 = vector.load %arg5[%c0_13, %c0_14] : memref<2x64xf32, #tpu.memory_space<vmem>>, vector<2x64xf32>
    tpu.vector_store %arg5[%c0_13, %c0_14], %32 {strides = array<i32>} : memref<2x64xf32, #tpu.memory_space<vmem>>, vector<2x64xf32>,
    return
  }
  func.func @transform_0(%arg0: i32) -> (i32, i32) {
    %c0_i32 = arith.constant 0 : i32
    %c0_i32_0 = arith.constant 0 : i32
    return %arg0, %c0_i32 : i32, i32
  }
  func.func @transform_1(%arg0: i32) -> (i32, i32) {
    %c0_i32 = arith.constant 0 : i32
    %c0_i32_0 = arith.constant 0 : i32
    %c0_i32_1 = arith.constant 0 : i32
    return %c0_i32, %c0_i32_0 : i32, i32
  }
  func.func @transform_2(%arg0: i32) -> (i32, i32) {
    %c0_i32 = arith.constant 0 : i32
    %c0_i32_0 = arith.constant 0 : i32
    %c0_i32_1 = arith.constant 0 : i32
    return %c0_i32, %c0_i32_0 : i32, i32
  }
  func.func @transform_3(%arg0: i32) -> (i32, i32) {
    %c0_i32 = arith.constant 0 : i32
    %c0_i32_0 = arith.constant 0 : i32
    return %arg0, %c0_i32 : i32, i32
  }
  func.func @transform_4(%arg0: i32) -> (i32, i32) {
    %c0_i32 = arith.constant 0 : i32
    %c0_i32_0 = arith.constant 0 : i32
    return %arg0, %c0_i32 : i32, i32
  }
}

module attributes {stable_mosaic.version = 11 : i64} {
  func.func @_self_attn_kernel(%arg0: i32, %arg1: memref<16x32xf32, #tpu.memory_space<vmem>>, %arg2: memref<32x384xf32, #tpu.memory_space<vmem>>, %arg3: memref<1x384xf32, #tpu.memory_space<vmem>>, %arg4: memref<2x8x32xf32, #tpu.memory_space<vmem>>, %arg5: memref<2x8x8xf32, #tpu.memory_space<vmem>>) attributes {dimension_semantics = [#tpu.dimension_semantics<parallel>], iteration_bounds = array<i64: 1>, scalar_prefetch = 0 : i64, scratch_operands = 0 : i64, tpu.core_type = #tpu.core_type<tc>, window_params = [{transform_indices = @transform_0, window_bounds = array<i64: 16, 32>}, {pipeline_mode = #tpu.pipeline_mode<synchronous>, transform_indices = @transform_1, window_bounds = array<i64: 32, 384>}, {pipeline_mode = #tpu.pipeline_mode<synchronous>, transform_indices = @transform_2, window_bounds = array<i64: 1, 384>}, {transform_indices = @transform_3, window_bounds = array<i64: 2, 8, 32>}, {transform_indices = @transform_4, window_bounds = array<i64: 2, 8, 8>}]} {
    %c0 = arith.constant 0 : index
    %c0_0 = arith.constant 0 : index
    %0 = vector.load %arg1[%c0, %c0_0] : memref<16x32xf32, #tpu.memory_space<vmem>>, vector<16x32xf32>
    %c0_1 = arith.constant 0 : index
    %c0_2 = arith.constant 0 : index
    %1 = vector.load %arg2[%c0_1, %c0_2] : memref<32x384xf32, #tpu.memory_space<vmem>>, vector<32x384xf32>
    %c0_3 = arith.constant 0 : index
    %c0_4 = arith.constant 0 : index
    %2 = vector.load %arg3[%c0_3, %c0_4] : memref<1x384xf32, #tpu.memory_space<vmem>>, vector<1x384xf32>
    %cst = arith.constant dense<0.000000e+00> : vector<16x384xf32>
    %3 = tpu.matmul %0, %1, %cst {dimension_numbers = #tpu.dot_dimension_numbers<[1], [0], [0], [1], [0, 0, 1, 1], [], []>} : vector<16x32xf32>, vector<32x384xf32>, vector<16x384xf32> -> vector<16x384xf32>
    %4 = vector.broadcast %2 : vector<1x384xf32> to vector<16x384xf32>
    %5 = arith.addf %3, %4 : vector<16x384xf32>
    %6 = vector.extract_strided_slice %5 {offsets = [0, 0], sizes = [16, 32], strides = [1, 1]} : vector<16x384xf32> to vector<16x32xf32>
    %7 = vector.shape_cast %6 : vector<16x32xf32> to vector<2x8x32xf32>
    %8 = vector.extract_strided_slice %5 {offsets = [0, 128], sizes = [16, 32], strides = [1, 1]} : vector<16x384xf32> to vector<16x32xf32>
    %9 = vector.shape_cast %8 : vector<16x32xf32> to vector<2x8x32xf32>
    %10 = vector.extract_strided_slice %5 {offsets = [0, 256], sizes = [16, 32], strides = [1, 1]} : vector<16x384xf32> to vector<16x32xf32>
    %11 = vector.shape_cast %10 : vector<16x32xf32> to vector<2x8x32xf32>
    "tpu.trace_start"() <{level = 10 : i32, message = "bqf,bkf->bqk"}> : () -> ()
    %cst_5 = arith.constant dense<0.000000e+00> : vector<2x8x8xf32>
    %12 = tpu.matmul %7, %9, %cst_5 {dimension_numbers = #tpu.dot_dimension_numbers<[2], [2], [1], [1], [0, 0, 0, 1, 1, 1], [0], [0]>} : vector<2x8x32xf32>, vector<2x8x32xf32>, vector<2x8x8xf32> -> vector<2x8x8xf32>
    "tpu.trace_stop"() : () -> ()
    %cst_6 = arith.constant 0.176776692 : f32
    %13 = vector.broadcast %cst_6 : f32 to vector<2x8x8xf32>
    %14 = arith.mulf %12, %13 : vector<2x8x8xf32>
    %cst_7 = arith.constant dense<0xFF800000> : vector<2x8xf32>
    %15 = vector.multi_reduction <maximumf>, %14, %cst_7 [2] : vector<2x8x8xf32> to vector<2x8xf32>
    %16 = vector.shape_cast %15 : vector<2x8xf32> to vector<2x8x1xf32>
    %17 = vector.broadcast %16 : vector<2x8x1xf32> to vector<2x8x8xf32>
    %18 = arith.subf %14, %17 : vector<2x8x8xf32>
    %19 = math.exp %18 : vector<2x8x8xf32>
    %cst_8 = arith.constant dense<0.000000e+00> : vector<2x8xf32>
    %20 = vector.multi_reduction <add>, %19, %cst_8 [2] : vector<2x8x8xf32> to vector<2x8xf32>
    %21 = vector.shape_cast %20 : vector<2x8xf32> to vector<2x8x1xf32>
    %22 = tpu.reciprocal %21 {approx = true} : vector<2x8x1xf32> -> vector<2x8x1xf32>
    %23 = arith.mulf %21, %22 : vector<2x8x1xf32>
    %cst_9 = arith.constant 2.000000e+00 : f32
    %24 = vector.broadcast %cst_9 : f32 to vector<2x8x1xf32>
    %25 = arith.subf %24, %23 : vector<2x8x1xf32>
    %26 = arith.mulf %22, %25 : vector<2x8x1xf32>
    %27 = vector.broadcast %26 : vector<2x8x1xf32> to vector<2x8x8xf32>
    %28 = arith.mulf %19, %27 : vector<2x8x8xf32>
    "tpu.trace_start"() <{level = 10 : i32, message = "bqk,bkf->bqf"}> : () -> ()
    %cst_10 = arith.constant dense<0.000000e+00> : vector<2x8x32xf32>
    %29 = tpu.matmul %28, %11, %cst_10 {dimension_numbers = #tpu.dot_dimension_numbers<[2], [1], [1], [2], [0, 0, 0, 1, 1, 2], [0], [0]>} : vector<2x8x8xf32>, vector<2x8x32xf32>, vector<2x8x32xf32> -> vector<2x8x32xf32>
    "tpu.trace_stop"() : () -> ()
    %c0_11 = arith.constant 0 : index
    %c0_12 = arith.constant 0 : index
    %c0_13 = arith.constant 0 : index
    %30 = vector.load %arg4[%c0_11, %c0_12, %c0_13] : memref<2x8x32xf32, #tpu.memory_space<vmem>>, vector<2x8x32xf32>
    tpu.vector_store %arg4[%c0_11, %c0_12, %c0_13], %29 {strides = array<i32>} : memref<2x8x32xf32, #tpu.memory_space<vmem>>, vector<2x8x32xf32>,
    %c0_14 = arith.constant 0 : index
    %c0_15 = arith.constant 0 : index
    %c0_16 = arith.constant 0 : index
    %31 = vector.load %arg5[%c0_14, %c0_15, %c0_16] : memref<2x8x8xf32, #tpu.memory_space<vmem>>, vector<2x8x8xf32>
    tpu.vector_store %arg5[%c0_14, %c0_15, %c0_16], %28 {strides = array<i32>} : memref<2x8x8xf32, #tpu.memory_space<vmem>>, vector<2x8x8xf32>,
    return
  }
  func.func @transform_0(%arg0: i32) -> (i32, i32) {
    %c0_i32 = arith.constant 0 : i32
    %c0_i32_0 = arith.constant 0 : i32
    return %arg0, %c0_i32 : i32, i32
  }
  func.func @transform_1(%arg0: i32) -> (i32, i32) {
    %c0_i32 = arith.constant 0 : i32
    %c0_i32_0 = arith.constant 0 : i32
    %c0_i32_1 = arith.constant 0 : i32
    return %c0_i32, %c0_i32_0 : i32, i32
  }
  func.func @transform_2(%arg0: i32) -> (i32, i32) {
    %c0_i32 = arith.constant 0 : i32
    %c0_i32_0 = arith.constant 0 : i32
    %c0_i32_1 = arith.constant 0 : i32
    return %c0_i32, %c0_i32_0 : i32, i32
  }
  func.func @transform_3(%arg0: i32) -> (i32, i32, i32) {
    %c0_i32 = arith.constant 0 : i32
    %c0_i32_0 = arith.constant 0 : i32
    %c0_i32_1 = arith.constant 0 : i32
    return %arg0, %c0_i32, %c0_i32_0 : i32, i32, i32
  }
  func.func @transform_4(%arg0: i32) -> (i32, i32, i32) {
    %c0_i32 = arith.constant 0 : i32
    %c0_i32_0 = arith.constant 0 : i32
    %c0_i32_1 = arith.constant 0 : i32
    return %arg0, %c0_i32, %c0_i32_0 : i32, i32, i32
  }
}

</mosaic_0001>

<llo_original>
// kernel: tpu_custom_call.1
$region0: #{tpu_custom_call.1}
  #allocation0 [shape = 'u32[]', space=smem, size = 0x4, offset = 0x4, fixed_abs, tag = 'smem constant byte address 0x4 - core index']
  #allocation1 [shape = 'u32[144,128]{1,0:T(1,128)}', space=vmem, size = 0x12000, scoped, tag = 'internal scratch']
  %s0 = inlined_call_operand.hbm [shape: f32[16,32], index: 0, kind: input, shape index: {}]
  %s1 = inlined_call_operand.hbm [shape: f32[32,384], index: 1, kind: input, shape index: {}]
  %s2 = inlined_call_operand.vmem [shape: f32[1,384], index: 2, kind: input, shape index: {}]
  %s3 = inlined_call_operand.hbm [shape: f32[2,256], index: 3, kind: output, shape index: {0}]
  %s4 = inlined_call_operand.hbm [shape: f32[2,64], index: 4, kind: output, shape index: {1}]
  %5 = xla_tuple %s3, %s4
  %s6 = sld [smem:[#allocation0]]
  $region38: #{tpu_custom_call.1} parent=0
    _
  %s8 = ssub.s32 1, %s6
  %s9 = scalar_select 0, %s8, %s6
  $region1: #{tpu_custom_call.1} parent=0
    #allocation2 [shape = 'u8[8192]{0}', space=vmem, size = 0x2000, scoped, tag = 'input window, operand 0, single buffered']
    #allocation3 [shape = 's32[1]{0}', space=sflag, size = 0x4, scoped, tag = 'scoped memory for tpu_custom_call.1']
    #allocation4 [shape = 's32[1]{0}', space=sflag, size = 0x4, scoped, tag = 'scoped memory for tpu_custom_call.1']
    #allocation5 [shape = 'u8[49152]{0}', space=vmem, size = 0xc000, scoped, tag = 'input window, operand 1, single buffered']
    #allocation6 [shape = 's32[1]{0}', space=sflag, size = 0x4, scoped, tag = 'scoped memory for tpu_custom_call.1']
    #allocation7 [shape = 'u8[2048]{0}', space=vmem, size = 0x800, scoped, tag = 'output window, operand 0, single buffered']
    #allocation8 [shape = 'u8[1024]{0}', space=vmem, size = 0x400, scoped, tag = 'output window, operand 1, single buffered']
    #allocation9 [shape = 's32[1]{0}', space=sflag, size = 0x4, scoped, tag = 'scoped memory for tpu_custom_call.1']
    %10 = vsyncpa [#allocation3], 0
    %11 = vsyncpa [#allocation6], 0
    %12 = vsyncpa [#allocation4], 0
    %13 = vsyncpa [#allocation9], 0
    // Predicated region
    $region2: #{tpu_custom_call.1} parent=1 // pred_check
      _
    $region3: #{tpu_custom_call.1} parent=1 // pred_check_branch
      %15 = sbr.rel (0) target = $region5
    $region4: #{tpu_custom_call.1} parent=1 // pred_region
      %s17 = ssub.s32 256, 256
      %18 = vsyncadd [#allocation3], %s17
      %s19 = sshll.u32 [#allocation2], 4
      %s20 = int_to_ptr.vmem [resolvable:$true] %s19
      %25 = dma.hbm_to_vmem [thread:$0]  %s0, 256, %s20, [#allocation3], 128, 128, 8
    $region5: #{tpu_custom_call.1} parent=1 // pred_fallthru
      _
    // Predicated region
    $region6: #{tpu_custom_call.1} parent=1 // pred_check
      _
    $region7: #{tpu_custom_call.1} parent=1 // pred_check_branch
      %27 = sbr.rel (0) target = $region9
    $region8: #{tpu_custom_call.1} parent=1 // pred_region
      %s29 = ssub.s32 1536, 1536
      %30 = vsyncadd [#allocation6], %s29
      %s31 = sshll.u32 [#allocation5], 4
      %s32 = int_to_ptr.vmem [resolvable:$true] %s31
      %37 = dma.hbm_to_vmem [thread:$0]  %s1, 1536, %s32, [#allocation6], 384, 384, 24
    $region9: #{tpu_custom_call.1} parent=1 // pred_fallthru
      _
    // Predicated region
    $region10: #{tpu_custom_call.1} parent=1 // pred_check
      _
    $region11: #{tpu_custom_call.1} parent=1 // pred_check_branch
      %39 = sbr.rel (0) target = $region13
    $region12: #{tpu_custom_call.1} parent=1 // pred_region
      _
    $region13: #{tpu_custom_call.1} parent=1 // pred_fallthru
      _
    // Predicated region
    $region14: #{tpu_custom_call.1} parent=1 // pred_check
      _
    $region15: #{tpu_custom_call.1} parent=1 // pred_check_branch
      %41 = sbr.rel (0) target = $region17
    $region16: #{tpu_custom_call.1} parent=1 // pred_region
      %42 = dma.done [#allocation3], 256
    $region17: #{tpu_custom_call.1} parent=1 // pred_fallthru
      _
    // Predicated region
    $region18: #{tpu_custom_call.1} parent=1 // pred_check
      _
    $region19: #{tpu_custom_call.1} parent=1 // pred_check_branch
      %44 = sbr.rel (0) target = $region21
    $region20: #{tpu_custom_call.1} parent=1 // pred_region
      %45 = dma.done [#allocation6], 1536
    $region21: #{tpu_custom_call.1} parent=1 // pred_fallthru
      _
    %v46 = vld [vmem:[#allocation2] sm:$0xff]
    %v47 = vld [vmem:[#allocation2 + $0x8] sm:$0xff]
    %v48 = vld [vmem:[#allocation5] sm:$0xff]
    %v49 = vld [vmem:[#allocation5 + $0x8] sm:$0xff]
    %v50 = vld [vmem:[#allocation5 + $0x10] sm:$0xff]
    %v51 = vld [vmem:[#allocation5 + $0x18] sm:$0xff]
    %v52 = vld [vmem:[#allocation5 + $0x20] sm:$0xff]
    %v53 = vld [vmem:[#allocation5 + $0x28] sm:$0xff]
    %v54 = vld [vmem:[#allocation5 + $0x30] sm:$0xff]
    %v55 = vld [vmem:[#allocation5 + $0x38] sm:$0xff]
    %v56 = vld [vmem:[#allocation5 + $0x40] sm:$0xff]
    %v57 = vld [vmem:[#allocation5 + $0x48] sm:$0xff]
    %v58 = vld [vmem:[#allocation5 + $0x50] sm:$0xff]
    %v59 = vld [vmem:[#allocation5 + $0x58] sm:$0xff]
    %v60 = vld [vmem:[%s2] sm:$0x7]
    %v62 = vlaneseq
    %v63 = vshrl.u32 %v62, 7
    %v64 = vsub.s32 0, %v63
    %v65 = vrot.slane %v60, %v64
    %v66 = vlaneseq
    %v67 = vshrl.u32 %v66, 7
    %v68 = vsub.s32 1, %v67
    %v69 = vrot.slane %v60, %v68
    %v70 = vlaneseq
    %v71 = vshrl.u32 %v70, 7
    %v72 = vsub.s32 2, %v71
    %v73 = vrot.slane %v60, %v72
    %vm77 = vcmask 261120
    %v79 = vsel %vm77, %v46, 0
    %v82 = vsel %vm77, %v47, 0
    %84 = vmatprep.subr.mxu0 %v49
    %85 = vmatpush1.msra.mxu0 %v48
    %86 = vmatprep.subr.mxu0 %v52
    %87 = vmatpush1.msra.mxu0 %v51
    %88 = vmatprep.subr.mxu0 %v55
    %89 = vmatpush1.msra.mxu0 %v54
    %90 = vmatprep.subr.mxu0 %v58
    %91 = vmatpush1.msra.mxu0 %v57
    %92 = vmatprep.subr.mxu0 0.0
    %93 = vmatpush1.msra.mxu0 0.0
    %94 = vmatprep.subr.mxu0 0.0
    %95 = vmatpush1.msra.mxu0 0.0
    %96 = vmatprep.subr.mxu0 0.0
    %97 = vmatpush1.msra.mxu0 0.0
    %98 = vmatprep.subr.mxu0 0.0
    %99 = vmatpush1.msra.mxu0 0.0
    %100 = vmatprep.subr.mxu0 0.0
    %101 = vmatpush1.msra.mxu0 0.0
    %102 = vmatprep.subr.mxu0 0.0
    %103 = vmatpush1.msra.mxu0 0.0
    %104 = vmatprep.subr.mxu0 0.0
    %105 = vmatpush1.msra.mxu0 0.0
    %106 = vmatprep.subr.mxu0 0.0
    %107 = vmatpush1.msra.mxu0 0.0
    %108 = vmatprep.subr.mxu0 0.0
    %109 = vmatpush1.msra.mxu0 0.0
    %110 = vmatprep.subr.mxu0 0.0
    %111 = vmatpush1.msra.mxu0 0.0
    %112 = vmatprep.subr.mxu0 0.0
    %113 = vmatpush1.msra.mxu0 0.0
    %114 = vmatprep.subr.mxu0 0.0
    %115 = vmatpush1.msra.mxu0 0.0
    %116 = vmatprep.subr.mxu0 0.0
    %117 = vmatpush1.msra.mxu0 0.0
    %118 = vmatprep.subr.mxu0 0.0
    %119 = vmatpush1.msra.mxu0 0.0
    %120 = vmatprep.subr.mxu0 0.0
    %121 = vmatpush1.msra.mxu0 0.0
    %122 = vmatprep.subr.mxu0 0.0
    %123 = vmatpush1.msra.mxu0 0.0
    %124 = vmatprep.subr.mxu0 0.0
    %125 = vmatpush1.msra.mxu0 0.0
    %126 = vmatprep.subr.mxu0 0.0
    %127 = vmatpush1.msra.mxu0 0.0
    %128 = vmatprep.subr.mxu0 0.0
    %129 = vmatpush1.msra.mxu0 0.0
    %130 = vmatprep.subr.mxu0 0.0
    %131 = vmatpush1.msra.mxu0 0.0
    %132 = vmatprep.subr.mxu0 0.0
    %133 = vmatpush1.msra.mxu0 0.0
    %134 = vmatprep.subr.mxu0 0.0
    %135 = vmatpush1.msra.mxu0 0.0
    %136 = vmatprep.subr.mxu0 0.0
    %137 = vmatpush1.msra.mxu0 0.0
    %138 = vmatprep.subr.mxu0 0.0
    %139 = vmatpush1.msra.mxu0 0.0
    %140 = vmatprep.subr.mxu0 0.0
    %141 = vmatpush1.msra.mxu0 0.0
    %142 = vmatprep.subr.mxu0 0.0
    %143 = vmatpush1.msra.mxu0 0.0
    %144 = vmatprep.subr.mxu0 0.0
    %145 = vmatpush1.msra.mxu0 0.0
    %146 = vmatprep.subr.mxu0 0.0
    %147 = vmatpush1.msra.mxu0 0.0
    %148 = vmatprep.mubr.f32.mxu0 0.0
    %149 = vmatmul.mubr.f32.gmra.mrb[0].mxu0 %v79
    %v150 = vpop.f32.mrb[0].mxu0
    %v151 = vadd.f32 %v65, %v150
    %v152 = vpop.f32.mrb[0].mxu0
    %v153 = vadd.f32 %v69, %v152
    %154 = vmatprep.mubr.f32.mxu0 0.0
    %155 = vmatmul.mubr.f32.gmra.mrb[0].mxu0 %v82
    %v156 = vpop.f32.mrb[0].mxu0
    %v157 = vadd.f32 %v65, %v156
    %v158 = vpop.f32.mrb[0].mxu0
    %v159 = vadd.f32 %v69, %v158
    %160 = vdwg.mxu0
    %161 = vmatprep.subr.mxu0 0.0
    %162 = vmatpush1.msra.mxu0 %v50
    %163 = vmatprep.subr.mxu0 0.0
    %164 = vmatpush1.msra.mxu0 %v53
    %165 = vmatprep.subr.mxu0 0.0
    %166 = vmatpush1.msra.mxu0 %v56
    %167 = vmatprep.subr.mxu0 0.0
    %168 = vmatpush1.msra.mxu0 %v59
    %169 = vmatprep.subr.mxu0 0.0
    %170 = vmatpush1.msra.mxu0 0.0
    %171 = vmatprep.subr.mxu0 0.0
    %172 = vmatpush1.msra.mxu0 0.0
    %173 = vmatprep.subr.mxu0 0.0
    %174 = vmatpush1.msra.mxu0 0.0
    %175 = vmatprep.subr.mxu0 0.0
    %176 = vmatpush1.msra.mxu0 0.0
    %177 = vmatprep.subr.mxu0 0.0
    %178 = vmatpush1.msra.mxu0 0.0
    %179 = vmatprep.subr.mxu0 0.0
    %180 = vmatpush1.msra.mxu0 0.0
    %181 = vmatprep.subr.mxu0 0.0
    %182 = vmatpush1.msra.mxu0 0.0
    %183 = vmatprep.subr.mxu0 0.0
    %184 = vmatpush1.msra.mxu0 0.0
    %185 = vmatprep.subr.mxu0 0.0
    %186 = vmatpush1.msra.mxu0 0.0
    %187 = vmatprep.subr.mxu0 0.0
    %188 = vmatpush1.msra.mxu0 0.0
    %189 = vmatprep.subr.mxu0 0.0
    %190 = vmatpush1.msra.mxu0 0.0
    %191 = vmatprep.subr.mxu0 0.0
    %192 = vmatpush1.msra.mxu0 0.0
    %193 = vmatprep.subr.mxu0 0.0
    %194 = vmatpush1.msra.mxu0 0.0
    %195 = vmatprep.subr.mxu0 0.0
    %196 = vmatpush1.msra.mxu0 0.0
    %197 = vmatprep.subr.mxu0 0.0
    %198 = vmatpush1.msra.mxu0 0.0
    %199 = vmatprep.subr.mxu0 0.0
    %200 = vmatpush1.msra.mxu0 0.0
    %201 = vmatprep.subr.mxu0 0.0
    %202 = vmatpush1.msra.mxu0 0.0
    %203 = vmatprep.subr.mxu0 0.0
    %204 = vmatpush1.msra.mxu0 0.0
    %205 = vmatprep.subr.mxu0 0.0
    %206 = vmatpush1.msra.mxu0 0.0
    %207 = vmatprep.subr.mxu0 0.0
    %208 = vmatpush1.msra.mxu0 0.0
    %209 = vmatprep.subr.mxu0 0.0
    %210 = vmatpush1.msra.mxu0 0.0
    %211 = vmatprep.subr.mxu0 0.0
    %212 = vmatpush1.msra.mxu0 0.0
    %213 = vmatprep.subr.mxu0 0.0
    %214 = vmatpush1.msra.mxu0 0.0
    %215 = vmatprep.subr.mxu0 0.0
    %216 = vmatpush1.msra.mxu0 0.0
    %217 = vmatprep.subr.mxu0 0.0
    %218 = vmatpush1.msra.mxu0 0.0
    %219 = vmatprep.subr.mxu0 0.0
    %220 = vmatpush1.msra.mxu0 0.0
    %221 = vmatprep.subr.mxu0 0.0
    %222 = vmatpush1.msra.mxu0 0.0
    %223 = vmatprep.subr.mxu0 0.0
    %224 = vmatpush1.msra.mxu0 0.0
    %225 = vmatprep.mubr.f32.mxu0 0.0
    %226 = vmatmul.mubr.f32.gmra.mrb[0].mxu0 %v79
    %v227 = vpop.f32.mrb[0].mxu0
    %v228 = vadd.f32 %v73, %v227
    %v229 = vpop.f32.mrb[0].mxu0
    %230 = vmatprep.mubr.f32.mxu0 0.0
    %231 = vmatmul.mubr.f32.gmra.mrb[0].mxu0 %v82
    %v232 = vpop.f32.mrb[0].mxu0
    %v233 = vadd.f32 %v73, %v232
    %v234 = vpop.f32.mrb[0].mxu0
    %235 = vdwg.mxu0
    %v237 = vsel %vm77, %v151, 0
    %v240 = vsel %vm77, %v153, 0
    %242 = vmatprep.subr.mxu0 0.0
    %243 = vmatpush1.xpose.msra.mxu0 %v240
    %244 = vmatprep.subr.mxu0 0.0
    %245 = vmatpush1.xpose.msra.mxu0 0.0
    %246 = vmatprep.subr.mxu0 0.0
    %247 = vmatpush1.xpose.msra.mxu0 0.0
    %248 = vmatprep.subr.mxu0 0.0
    %249 = vmatpush1.xpose.msra.mxu0 0.0
    %250 = vmatprep.subr.mxu0 0.0
    %251 = vmatpush1.xpose.msra.mxu0 0.0
    %252 = vmatprep.subr.mxu0 0.0
    %253 = vmatpush1.xpose.msra.mxu0 0.0
    %254 = vmatprep.subr.mxu0 0.0
    %255 = vmatpush1.xpose.msra.mxu0 0.0
    %256 = vmatprep.subr.mxu0 0.0
    %257 = vmatpush1.xpose.msra.mxu0 0.0
    %258 = vmatprep.subr.mxu0 0.0
    %259 = vmatpush1.xpose.msra.mxu0 0.0
    %260 = vmatprep.subr.mxu0 0.0
    %261 = vmatpush1.xpose.msra.mxu0 0.0
    %262 = vmatprep.subr.mxu0 0.0
    %263 = vmatpush1.xpose.msra.mxu0 0.0
    %264 = vmatprep.subr.mxu0 0.0
    %265 = vmatpush1.xpose.msra.mxu0 0.0
    %266 = vmatprep.subr.mxu0 0.0
    %267 = vmatpush1.xpose.msra.mxu0 0.0
    %268 = vmatprep.subr.mxu0 0.0
    %269 = vmatpush1.xpose.msra.mxu0 0.0
    %270 = vmatprep.subr.mxu0 0.0
    %271 = vmatpush1.xpose.msra.mxu0 0.0
    %272 = vmatprep.subr.mxu0 0.0
    %273 = vmatpush1.xpose.msra.mxu0 0.0
    %274 = vmatprep.subr.mxu0 0.0
    %275 = vmatpush1.xpose.msra.mxu0 0.0
    %276 = vmatprep.subr.mxu0 0.0
    %277 = vmatpush1.xpose.msra.mxu0 0.0
    %278 = vmatprep.subr.mxu0 0.0
    %279 = vmatpush1.xpose.msra.mxu0 0.0
    %280 = vmatprep.subr.mxu0 0.0
    %281 = vmatpush1.xpose.msra.mxu0 0.0
    %282 = vmatprep.subr.mxu0 0.0
    %283 = vmatpush1.xpose.msra.mxu0 0.0
    %284 = vmatprep.subr.mxu0 0.0
    %285 = vmatpush1.xpose.msra.mxu0 0.0
    %286 = vmatprep.subr.mxu0 0.0
    %287 = vmatpush1.xpose.msra.mxu0 0.0
    %288 = vmatprep.subr.mxu0 0.0
    %289 = vmatpush1.xpose.msra.mxu0 0.0
    %290 = vmatprep.subr.mxu0 0.0
    %291 = vmatpush1.xpose.msra.mxu0 0.0
    %292 = vmatprep.subr.mxu0 0.0
    %293 = vmatpush1.xpose.msra.mxu0 0.0
    %294 = vmatprep.subr.mxu0 0.0
    %295 = vmatpush1.xpose.msra.mxu0 0.0
    %296 = vmatprep.subr.mxu0 0.0
    %297 = vmatpush1.xpose.msra.mxu0 0.0
    %298 = vmatprep.subr.mxu0 0.0
    %299 = vmatpush1.xpose.msra.mxu0 0.0
    %300 = vmatprep.subr.mxu0 0.0
    %301 = vmatpush1.xpose.msra.mxu0 0.0
    %302 = vmatprep.subr.mxu0 0.0
    %303 = vmatpush1.xpose.msra.mxu0 0.0
    %304 = vmatprep.subr.mxu0 0.0
    %305 = vmatpush1.xpose.msra.mxu0 0.0
    %306 = vmatprep.mubr.f32.mxu0 0.0
    %307 = vmatmul.mubr.f32.gmra.mrb[0].mxu0 %v237
    %v308 = vpop.f32.mrb[0].mxu0
    %v309 = vadd.f32 0.0, %v308
    %v310 = vpop.f32.mrb[0].mxu0
    %311 = vdwg.mxu0
    %v313 = vsel %vm77, %v157, 0
    %v316 = vsel %vm77, %v159, 0
    %318 = vmatprep.subr.mxu0 0.0
    %319 = vmatpush1.xpose.msra.mxu0 %v316
    %320 = vmatprep.subr.mxu0 0.0
    %321 = vmatpush1.xpose.msra.mxu0 0.0
    %322 = vmatprep.subr.mxu0 0.0
    %323 = vmatpush1.xpose.msra.mxu0 0.0
    %324 = vmatprep.subr.mxu0 0.0
    %325 = vmatpush1.xpose.msra.mxu0 0.0
    %326 = vmatprep.subr.mxu0 0.0
    %327 = vmatpush1.xpose.msra.mxu0 0.0
    %328 = vmatprep.subr.mxu0 0.0
    %329 = vmatpush1.xpose.msra.mxu0 0.0
    %330 = vmatprep.subr.mxu0 0.0
    %331 = vmatpush1.xpose.msra.mxu0 0.0
    %332 = vmatprep.subr.mxu0 0.0
    %333 = vmatpush1.xpose.msra.mxu0 0.0
    %334 = vmatprep.subr.mxu0 0.0
    %335 = vmatpush1.xpose.msra.mxu0 0.0
    %336 = vmatprep.subr.mxu0 0.0
    %337 = vmatpush1.xpose.msra.mxu0 0.0
    %338 = vmatprep.subr.mxu0 0.0
    %339 = vmatpush1.xpose.msra.mxu0 0.0
    %340 = vmatprep.subr.mxu0 0.0
    %341 = vmatpush1.xpose.msra.mxu0 0.0
    %342 = vmatprep.subr.mxu0 0.0
    %343 = vmatpush1.xpose.msra.mxu0 0.0
    %344 = vmatprep.subr.mxu0 0.0
    %345 = vmatpush1.xpose.msra.mxu0 0.0
    %346 = vmatprep.subr.mxu0 0.0
    %347 = vmatpush1.xpose.msra.mxu0 0.0
    %348 = vmatprep.subr.mxu0 0.0
    %349 = vmatpush1.xpose.msra.mxu0 0.0
    %350 = vmatprep.subr.mxu0 0.0
    %351 = vmatpush1.xpose.msra.mxu0 0.0
    %352 = vmatprep.subr.mxu0 0.0
    %353 = vmatpush1.xpose.msra.mxu0 0.0
    %354 = vmatprep.subr.mxu0 0.0
    %355 = vmatpush1.xpose.msra.mxu0 0.0
    %356 = vmatprep.subr.mxu0 0.0
    %357 = vmatpush1.xpose.msra.mxu0 0.0
    %358 = vmatprep.subr.mxu0 0.0
    %359 = vmatpush1.xpose.msra.mxu0 0.0
    %360 = vmatprep.subr.mxu0 0.0
    %361 = vmatpush1.xpose.msra.mxu0 0.0
    %362 = vmatprep.subr.mxu0 0.0
    %363 = vmatpush1.xpose.msra.mxu0 0.0
    %364 = vmatprep.subr.mxu0 0.0
    %365 = vmatpush1.xpose.msra.mxu0 0.0
    %366 = vmatprep.subr.mxu0 0.0
    %367 = vmatpush1.xpose.msra.mxu0 0.0
    %368 = vmatprep.subr.mxu0 0.0
    %369 = vmatpush1.xpose.msra.mxu0 0.0
    %370 = vmatprep.subr.mxu0 0.0
    %371 = vmatpush1.xpose.msra.mxu0 0.0
    %372 = vmatprep.subr.mxu0 0.0
    %373 = vmatpush1.xpose.msra.mxu0 0.0
    %374 = vmatprep.subr.mxu0 0.0
    %375 = vmatpush1.xpose.msra.mxu0 0.0
    %376 = vmatprep.subr.mxu0 0.0
    %377 = vmatpush1.xpose.msra.mxu0 0.0
    %378 = vmatprep.subr.mxu0 0.0
    %379 = vmatpush1.xpose.msra.mxu0 0.0
    %380 = vmatprep.subr.mxu0 0.0
    %381 = vmatpush1.xpose.msra.mxu0 0.0
    %382 = vmatprep.mubr.f32.mxu0 0.0
    %383 = vmatmul.mubr.f32.gmra.mrb[0].mxu0 %v313
    %v384 = vpop.f32.mrb[0].mxu0
    %v385 = vadd.f32 0.0, %v384
    %v386 = vpop.f32.mrb[0].mxu0
    %387 = vdwg.mxu0
    %v388 = vmul.f32 %v309, 0.17677669
    %v389 = vmul.f32 %v385, 0.17677669
    %vm390 = vcmask 64512
    %v391 = vsel %vm390, %v388, -inf
    %392 = vmax.xlane.f32.xlu0 %v391
    %v393 = vpop.xlane.xlu0 %392
    %v394 = vsel %vm390, %v389, -inf
    %395 = vmax.xlane.f32.xlu0 %v394
    %v396 = vpop.xlane.xlu0 %395
    %v397 = vsub.f32 %v388, %v393
    %v398 = vsub.f32 %v389, %v396
    %v399 = vmul.f32 %v397, 1.442695
    %v400 = vpow.pop %v399
    %v401 = vmul.f32 %v398, 1.442695
    %v402 = vpow.pop %v401
    %v403 = vsel %vm390, %v400, 0.0
    %404 = vadd.xlane.f32.xlu0 %v403
    %v405 = vpop.xlane.xlu0 %404
    %v406 = vsel %vm390, %v402, 0.0
    %407 = vadd.xlane.f32.xlu0 %v406
    %v408 = vpop.xlane.xlu0 %407
    %v409 = vrcp.pop %v405
    %v410 = vrcp.pop %v408
    %v411 = vmul.f32 %v405, %v409
    %v412 = vmul.f32 %v408, %v410
    %v413 = vsub.f32 2.0, %v411
    %v414 = vsub.f32 2.0, %v412
    %v415 = vmul.f32 %v409, %v413
    %v416 = vmul.f32 %v410, %v414
    %v417 = vmul.f32 %v400, %v415
    %v418 = vmul.f32 %v402, %v416
    %v420 = vsel %vm390, %v417, 0
    %422 = vmatprep.subr.mxu0 0.0
    %423 = vmatpush1.msra.mxu0 %v228
    %424 = vmatprep.subr.mxu0 0.0
    %425 = vmatpush1.msra.mxu0 0.0
    %426 = vmatprep.subr.mxu0 0.0
    %427 = vmatpush1.msra.mxu0 0.0
    %428 = vmatprep.subr.mxu0 0.0
    %429 = vmatpush1.msra.mxu0 0.0
    %430 = vmatprep.subr.mxu0 0.0
    %431 = vmatpush1.msra.mxu0 0.0
    %432 = vmatprep.subr.mxu0 0.0
    %433 = vmatpush1.msra.mxu0 0.0
    %434 = vmatprep.subr.mxu0 0.0
    %435 = vmatpush1.msra.mxu0 0.0
    %436 = vmatprep.subr.mxu0 0.0
    %437 = vmatpush1.msra.mxu0 0.0
    %438 = vmatprep.subr.mxu0 0.0
    %439 = vmatpush1.msra.mxu0 0.0
    %440 = vmatprep.subr.mxu0 0.0
    %441 = vmatpush1.msra.mxu0 0.0
    %442 = vmatprep.subr.mxu0 0.0
    %443 = vmatpush1.msra.mxu0 0.0
    %444 = vmatprep.subr.mxu0 0.0
    %445 = vmatpush1.msra.mxu0 0.0
    %446 = vmatprep.subr.mxu0 0.0
    %447 = vmatpush1.msra.mxu0 0.0
    %448 = vmatprep.subr.mxu0 0.0
    %449 = vmatpush1.msra.mxu0 0.0
    %450 = vmatprep.subr.mxu0 0.0
    %451 = vmatpush1.msra.mxu0 0.0
    %452 = vmatprep.subr.mxu0 0.0
    %453 = vmatpush1.msra.mxu0 0.0
    %454 = vmatprep.subr.mxu0 0.0
    %455 = vmatpush1.msra.mxu0 0.0
    %456 = vmatprep.subr.mxu0 0.0
    %457 = vmatpush1.msra.mxu0 0.0
    %458 = vmatprep.subr.mxu0 0.0
    %459 = vmatpush1.msra.mxu0 0.0
    %460 = vmatprep.subr.mxu0 0.0
    %461 = vmatpush1.msra.mxu0 0.0
    %462 = vmatprep.subr.mxu0 0.0
    %463 = vmatpush1.msra.mxu0 0.0
    %464 = vmatprep.subr.mxu0 0.0
    %465 = vmatpush1.msra.mxu0 0.0
    %466 = vmatprep.subr.mxu0 0.0
    %467 = vmatpush1.msra.mxu0 0.0
    %468 = vmatprep.subr.mxu0 0.0
    %469 = vmatpush1.msra.mxu0 0.0
    %470 = vmatprep.subr.mxu0 0.0
    %471 = vmatpush1.msra.mxu0 0.0
    %472 = vmatprep.subr.mxu0 0.0
    %473 = vmatpush1.msra.mxu0 0.0
    %474 = vmatprep.subr.mxu0 0.0
    %475 = vmatpush1.msra.mxu0 0.0
    %476 = vmatprep.subr.mxu0 0.0
    %477 = vmatpush1.msra.mxu0 0.0
    %478 = vmatprep.subr.mxu0 0.0
    %479 = vmatpush1.msra.mxu0 0.0
    %480 = vmatprep.subr.mxu0 0.0
    %481 = vmatpush1.msra.mxu0 0.0
    %482 = vmatprep.subr.mxu0 0.0
    %483 = vmatpush1.msra.mxu0 0.0
    %484 = vmatprep.subr.mxu0 0.0
    %485 = vmatpush1.msra.mxu0 0.0
    %486 = vmatprep.mubr.f32.mxu0 0.0
    %487 = vmatmul.mubr.f32.gmra.mrb[0].mxu0 %v420
    %v488 = vpop.f32.mrb[0].mxu0
    %v489 = vadd.f32 0.0, %v488
    %v490 = vpop.f32.mrb[0].mxu0
    %491 = vdwg.mxu0
    %v493 = vsel %vm390, %v418, 0
    %495 = vmatprep.subr.mxu0 0.0
    %496 = vmatpush1.msra.mxu0 %v233
    %497 = vmatprep.subr.mxu0 0.0
    %498 = vmatpush1.msra.mxu0 0.0
    %499 = vmatprep.subr.mxu0 0.0
    %500 = vmatpush1.msra.mxu0 0.0
    %501 = vmatprep.subr.mxu0 0.0
    %502 = vmatpush1.msra.mxu0 0.0
    %503 = vmatprep.subr.mxu0 0.0
    %504 = vmatpush1.msra.mxu0 0.0
    %505 = vmatprep.subr.mxu0 0.0
    %506 = vmatpush1.msra.mxu0 0.0
    %507 = vmatprep.subr.mxu0 0.0
    %508 = vmatpush1.msra.mxu0 0.0
    %509 = vmatprep.subr.mxu0 0.0
    %510 = vmatpush1.msra.mxu0 0.0
    %511 = vmatprep.subr.mxu0 0.0
    %512 = vmatpush1.msra.mxu0 0.0
    %513 = vmatprep.subr.mxu0 0.0
    %514 = vmatpush1.msra.mxu0 0.0
    %515 = vmatprep.subr.mxu0 0.0
    %516 = vmatpush1.msra.mxu0 0.0
    %517 = vmatprep.subr.mxu0 0.0
    %518 = vmatpush1.msra.mxu0 0.0
    %519 = vmatprep.subr.mxu0 0.0
    %520 = vmatpush1.msra.mxu0 0.0
    %521 = vmatprep.subr.mxu0 0.0
    %522 = vmatpush1.msra.mxu0 0.0
    %523 = vmatprep.subr.mxu0 0.0
    %524 = vmatpush1.msra.mxu0 0.0
    %525 = vmatprep.subr.mxu0 0.0
    %526 = vmatpush1.msra.mxu0 0.0
    %527 = vmatprep.subr.mxu0 0.0
    %528 = vmatpush1.msra.mxu0 0.0
    %529 = vmatprep.subr.mxu0 0.0
    %530 = vmatpush1.msra.mxu0 0.0
    %531 = vmatprep.subr.mxu0 0.0
    %532 = vmatpush1.msra.mxu0 0.0
    %533 = vmatprep.subr.mxu0 0.0
    %534 = vmatpush1.msra.mxu0 0.0
    %535 = vmatprep.subr.mxu0 0.0
    %536 = vmatpush1.msra.mxu0 0.0
    %537 = vmatprep.subr.mxu0 0.0
    %538 = vmatpush1.msra.mxu0 0.0
    %539 = vmatprep.subr.mxu0 0.0
    %540 = vmatpush1.msra.mxu0 0.0
    %541 = vmatprep.subr.mxu0 0.0
    %542 = vmatpush1.msra.mxu0 0.0
    %543 = vmatprep.subr.mxu0 0.0
    %544 = vmatpush1.msra.mxu0 0.0
    %545 = vmatprep.subr.mxu0 0.0
    %546 = vmatpush1.msra.mxu0 0.0
    %547 = vmatprep.subr.mxu0 0.0
    %548 = vmatpush1.msra.mxu0 0.0
    %549 = vmatprep.subr.mxu0 0.0
    %550 = vmatpush1.msra.mxu0 0.0
    %551 = vmatprep.subr.mxu0 0.0
    %552 = vmatpush1.msra.mxu0 0.0
    %553 = vmatprep.subr.mxu0 0.0
    %554 = vmatpush1.msra.mxu0 0.0
    %555 = vmatprep.subr.mxu0 0.0
    %556 = vmatpush1.msra.mxu0 0.0
    %557 = vmatprep.subr.mxu0 0.0
    %558 = vmatpush1.msra.mxu0 0.0
    %559 = vmatprep.mubr.f32.mxu0 0.0
    %560 = vmatmul.mubr.f32.gmra.mrb[0].mxu0 %v493
    %v561 = vpop.f32.mrb[0].mxu0
    %v562 = vadd.f32 0.0, %v561
    %v563 = vpop.f32.mrb[0].mxu0
    %564 = vdwg.mxu0
    %v565 = vcombine.high %v489, 0.0
    %v567 = vunpack.c.l.s4 1983009808
    %v568 = vunpack.c.0.s8 %v567
    %v569 = vlaneseq
    %v570 = vshrl.u32 %v569, 7
    %v571 = vsub.s32 %v568, %v570
    %v572 = vrot.slane %v489, %v571
    %v574 = vunpack.c.l.s4 1983009808
    %v575 = vunpack.c.0.s8 %v574
    %v576 = vlaneseq
    %v577 = vshrl.u32 %v576, 7
    %v578 = vsub.s32 %v575, %v577
    %v579 = vrot.slane %v565, %v578
    %v580 = vcombine.high %v562, 0.0
    %v582 = vunpack.c.l.s4 1983009808
    %v583 = vunpack.c.0.s8 %v582
    %v584 = vlaneseq
    %v585 = vshrl.u32 %v584, 7
    %v586 = vsub.s32 %v583, %v585
    %v587 = vrot.slane %v562, %v586
    %v589 = vunpack.c.l.s4 1983009808
    %v590 = vunpack.c.0.s8 %v589
    %v591 = vlaneseq
    %v592 = vshrl.u32 %v591, 7
    %v593 = vsub.s32 %v590, %v592
    %v594 = vrot.slane %v580, %v593
    %v595 = vcombine.low %v572, %v587
    %v596 = vcombine.high %v572, %v587
    %v598 = vunpack.c.l.s4 1934713408
    %v599 = vunpack.c.0.s8 %v598
    %v600 = vlaneseq
    %v601 = vshrl.u32 %v600, 7
    %v602 = vsub.s32 %v599, %v601
    %v603 = vrot.slane %v595, %v602
    %v605 = vunpack.c.l.s4 1934713408
    %v606 = vunpack.c.0.s8 %v605
    %v607 = vlaneseq
    %v608 = vshrl.u32 %v607, 7
    %v609 = vsub.s32 %v606, %v608
    %v610 = vrot.slane %v596, %v609
    %v611 = vcombine.low %v579, %v594
    %v612 = vcombine.high %v579, %v594
    %v614 = vunpack.c.l.s4 1934713408
    %v615 = vunpack.c.0.s8 %v614
    %v616 = vlaneseq
    %v617 = vshrl.u32 %v616, 7
    %v618 = vsub.s32 %v615, %v617
    %v619 = vrot.slane %v611, %v618
    %v621 = vunpack.c.l.s4 1934713408
    %v622 = vunpack.c.0.s8 %v621
    %v623 = vlaneseq
    %v624 = vshrl.u32 %v623, 7
    %v625 = vsub.s32 %v622, %v624
    %v626 = vrot.slane %v612, %v625
    %v627 = vcombine.high %v603, 0.0
    %v628 = vcombine.high %v610, 0.0
    %v629 = vcombine.high %v619, 0.0
    %v630 = vcombine.high %v626, 0.0
    %632 = vrot.lane.b32.xlu0 %v627, 32
    %v633 = vpop.permute.xlu0 %632
    %636 = vrot.lane.b32.xlu0 %v610, 64
    %v637 = vpop.permute.xlu0 %636
    %640 = vrot.lane.b32.xlu0 %v628, 96
    %v641 = vpop.permute.xlu0 %640
    %644 = vrot.lane.b32.xlu0 %v629, 32
    %v645 = vpop.permute.xlu0 %644
    %648 = vrot.lane.b32.xlu0 %v626, 64
    %v649 = vpop.permute.xlu0 %648
    %652 = vrot.lane.b32.xlu0 %v630, 96
    %v653 = vpop.permute.xlu0 %652
    %v655 = vsel %vm77, %v603, %v633
    %vm656 = vcmask 523264
    %v657 = vsel %vm656, %v655, %v637
    %vm658 = vcmask 785408
    %v659 = vsel %vm658, %v657, %v641
    %v660 = vsel %vm77, %v619, %v645
    %v661 = vsel %vm656, %v660, %v649
    %v662 = vsel %vm658, %v661, %v653
    %v665 = vcombine.low %v659, %v662
    %v667 = vunpack.c.l.s4 1983009808
    %v668 = vunpack.c.0.s8 %v667
    %v669 = vlaneseq
    %v670 = vshrl.u32 %v669, 7
    %v671 = vsub.s32 %v668, %v670
    %v672 = vrot.slane %v665, %v671
    %674 = vst [vmem:[#allocation7] sm:$0xf] %v672
    %v675 = vcombine.high %v417, 0.0
    %v677 = vunpack.c.l.s4 1983009808
    %v678 = vunpack.c.0.s8 %v677
    %v679 = vlaneseq
    %v680 = vshrl.u32 %v679, 7
    %v681 = vsub.s32 %v678, %v680
    %v682 = vrot.slane %v417, %v681
    %v684 = vunpack.c.l.s4 1983009808
    %v685 = vunpack.c.0.s8 %v684
    %v686 = vlaneseq
    %v687 = vshrl.u32 %v686, 7
    %v688 = vsub.s32 %v685, %v687
    %v689 = vrot.slane %v675, %v688
    %v690 = vcombine.high %v418, 0.0
    %v692 = vunpack.c.l.s4 1983009808
    %v693 = vunpack.c.0.s8 %v692
    %v694 = vlaneseq
    %v695 = vshrl.u32 %v694, 7
    %v696 = vsub.s32 %v693, %v695
    %v697 = vrot.slane %v418, %v696
    %v699 = vunpack.c.l.s4 1983009808
    %v700 = vunpack.c.0.s8 %v699
    %v701 = vlaneseq
    %v702 = vshrl.u32 %v701, 7
    %v703 = vsub.s32 %v700, %v702
    %v704 = vrot.slane %v690, %v703
    %v705 = vcombine.low %v682, %v697
    %v706 = vcombine.high %v682, %v697
    %v708 = vunpack.c.l.s4 1934713408
    %v709 = vunpack.c.0.s8 %v708
    %v710 = vlaneseq
    %v711 = vshrl.u32 %v710, 7
    %v712 = vsub.s32 %v709, %v711
    %v713 = vrot.slane %v705, %v712
    %v715 = vunpack.c.l.s4 1934713408
    %v716 = vunpack.c.0.s8 %v715
    %v717 = vlaneseq
    %v718 = vshrl.u32 %v717, 7
    %v719 = vsub.s32 %v716, %v718
    %v720 = vrot.slane %v706, %v719
    %v721 = vcombine.low %v689, %v704
    %v722 = vcombine.high %v689, %v704
    %v724 = vunpack.c.l.s4 1934713408
    %v725 = vunpack.c.0.s8 %v724
    %v726 = vlaneseq
    %v727 = vshrl.u32 %v726, 7
    %v728 = vsub.s32 %v725, %v727
    %v729 = vrot.slane %v721, %v728
    %v731 = vunpack.c.l.s4 1934713408
    %v732 = vunpack.c.0.s8 %v731
    %v733 = vlaneseq
    %v734 = vshrl.u32 %v733, 7
    %v735 = vsub.s32 %v732, %v734
    %v736 = vrot.slane %v722, %v735
    %v737 = vcombine.high %v713, 0.0
    %v738 = vcombine.high %v720, 0.0
    %v739 = vcombine.high %v729, 0.0
    %v740 = vcombine.high %v736, 0.0
    %742 = vrot.lane.b32.xlu0 %v737, 8
    %v743 = vpop.permute.xlu0 %742
    %746 = vrot.lane.b32.xlu0 %v720, 16
    %v747 = vpop.permute.xlu0 %746
    %750 = vrot.lane.b32.xlu0 %v738, 24
    %v751 = vpop.permute.xlu0 %750
    %754 = vrot.lane.b32.xlu0 %v729, 32
    %v755 = vpop.permute.xlu0 %754
    %758 = vrot.lane.b32.xlu0 %v739, 40
    %v759 = vpop.permute.xlu0 %758
    %762 = vrot.lane.b32.xlu0 %v736, 48
    %v763 = vpop.permute.xlu0 %762
    %766 = vrot.lane.b32.xlu0 %v740, 56
    %v767 = vpop.permute.xlu0 %766
    %v769 = vsel %vm390, %v713, %v743
    %vm770 = vcmask 130048
    %v771 = vsel %vm770, %v769, %v747
    %vm772 = vcmask 195584
    %v773 = vsel %vm772, %v771, %v751
    %v774 = vsel %vm77, %v773, %v755
    %vm775 = vcmask 326656
    %v776 = vsel %vm775, %v774, %v759
    %vm777 = vcmask 392192
    %v778 = vsel %vm777, %v776, %v763
    %vm779 = vcmask 457728
    %v780 = vsel %vm779, %v778, %v767
    %vm781 = vcmask 517120
    %782 = vst.msk [vmem:[#allocation8] sm:$0x3] %vm781, %v780
    // Predicated region
    $region22: #{tpu_custom_call.1} parent=1 // pred_check
      _
    $region23: #{tpu_custom_call.1} parent=1 // pred_check_branch
      %784 = sbr.rel (0) target = $region25
    $region24: #{tpu_custom_call.1} parent=1 // pred_region
      %s786 = ssub.s32 64, 64
      %787 = vsyncadd [#allocation4], %s786
      %s789 = sshll.u32 [#allocation7], 4
      %s790 = int_to_ptr.vmem [resolvable:$true] %s789
      %792 = dma.vmem_to_hbm [thread:$0]  %s790, 64, %s3, [#allocation4]
    $region25: #{tpu_custom_call.1} parent=1 // pred_fallthru
      _
    // Predicated region
    $region26: #{tpu_custom_call.1} parent=1 // pred_check
      _
    $region27: #{tpu_custom_call.1} parent=1 // pred_check_branch
      %794 = sbr.rel (0) target = $region29
    $region28: #{tpu_custom_call.1} parent=1 // pred_region
      %s796 = ssub.s32 32, 32
      %797 = vsyncadd [#allocation9], %s796
      %s799 = sshll.u32 [#allocation8], 4
      %s800 = int_to_ptr.vmem [resolvable:$true] %s799
      %802 = dma.vmem_to_hbm [thread:$0]  %s800, 32, %s4, [#allocation9]
    $region29: #{tpu_custom_call.1} parent=1 // pred_fallthru
      _
    // Predicated region
    $region30: #{tpu_custom_call.1} parent=1 // pred_check
      _
    $region31: #{tpu_custom_call.1} parent=1 // pred_check_branch
      %804 = sbr.rel (0) target = $region33
    $region32: #{tpu_custom_call.1} parent=1 // pred_region
      %805 = dma.done [#allocation4], 64
    $region33: #{tpu_custom_call.1} parent=1 // pred_fallthru
      _
    // Predicated region
    $region34: #{tpu_custom_call.1} parent=1 // pred_check
      _
    $region35: #{tpu_custom_call.1} parent=1 // pred_check_branch
      %807 = sbr.rel (0) target = $region37
    $region36: #{tpu_custom_call.1} parent=1 // pred_region
      %808 = dma.done [#allocation9], 32
    $region37: #{tpu_custom_call.1} parent=1 // pred_fallthru
      _
    %809 = vsyncpa [#allocation3], 1
    %810 = vsyncpa [#allocation6], 1
    %811 = vsyncpa [#allocation4], 1
    %812 = vsyncpa [#allocation9], 1

// kernel: tpu_custom_call.1
$region0: #{tpu_custom_call.1}
  #allocation0 [shape = 'u32[]', space=smem, size = 0x4, offset = 0x4, fixed_abs, tag = 'smem constant byte address 0x4 - core index']
  #allocation1 [shape = 'u32[144,128]{1,0:T(1,128)}', space=vmem, size = 0x12000, scoped, tag = 'internal scratch']
  %s0 = inlined_call_operand.hbm [shape: f32[16,32], index: 0, kind: input, shape index: {}]
  %s1 = inlined_call_operand.hbm [shape: f32[32,384], index: 1, kind: input, shape index: {}]
  %s2 = inlined_call_operand.vmem [shape: f32[1,384], index: 2, kind: input, shape index: {}]
  %s3 = inlined_call_operand.hbm [shape: f32[2,8,32], index: 3, kind: output, shape index: {0}]
  %s4 = inlined_call_operand.hbm [shape: f32[2,8,8], index: 4, kind: output, shape index: {1}]
  %5 = xla_tuple %s3, %s4
  %s6 = sld [smem:[#allocation0]]
  $region38: #{tpu_custom_call.1} parent=0
    _
  %s8 = ssub.s32 1, %s6
  %s9 = scalar_select 0, %s8, %s6
  $region1: #{tpu_custom_call.1} parent=0
    #allocation2 [shape = 'u8[8192]{0}', space=vmem, size = 0x2000, scoped, tag = 'input window, operand 0, single buffered']
    #allocation3 [shape = 's32[1]{0}', space=sflag, size = 0x4, scoped, tag = 'scoped memory for tpu_custom_call.1']
    #allocation4 [shape = 's32[1]{0}', space=sflag, size = 0x4, scoped, tag = 'scoped memory for tpu_custom_call.1']
    #allocation5 [shape = 'u8[49152]{0}', space=vmem, size = 0xc000, scoped, tag = 'input window, operand 1, single buffered']
    #allocation6 [shape = 's32[1]{0}', space=sflag, size = 0x4, scoped, tag = 'scoped memory for tpu_custom_call.1']
    #allocation7 [shape = 'u8[8192]{0}', space=vmem, size = 0x2000, scoped, tag = 'output window, operand 0, single buffered']
    #allocation8 [shape = 'u8[8192]{0}', space=vmem, size = 0x2000, scoped, tag = 'output window, operand 1, single buffered']
    #allocation9 [shape = 's32[1]{0}', space=sflag, size = 0x4, scoped, tag = 'scoped memory for tpu_custom_call.1']
    %10 = vsyncpa [#allocation3], 0
    %11 = vsyncpa [#allocation6], 0
    %12 = vsyncpa [#allocation4], 0
    %13 = vsyncpa [#allocation9], 0
    // Predicated region
    $region2: #{tpu_custom_call.1} parent=1 // pred_check
      _
    $region3: #{tpu_custom_call.1} parent=1 // pred_check_branch
      %15 = sbr.rel (0) target = $region5
    $region4: #{tpu_custom_call.1} parent=1 // pred_region
      %s17 = ssub.s32 256, 256
      %18 = vsyncadd [#allocation3], %s17
      %s19 = sshll.u32 [#allocation2], 4
      %s20 = int_to_ptr.vmem [resolvable:$true] %s19
      %25 = dma.hbm_to_vmem [thread:$0]  %s0, 256, %s20, [#allocation3], 128, 128, 8
    $region5: #{tpu_custom_call.1} parent=1 // pred_fallthru
      _
    // Predicated region
    $region6: #{tpu_custom_call.1} parent=1 // pred_check
      _
    $region7: #{tpu_custom_call.1} parent=1 // pred_check_branch
      %27 = sbr.rel (0) target = $region9
    $region8: #{tpu_custom_call.1} parent=1 // pred_region
      %s29 = ssub.s32 1536, 1536
      %30 = vsyncadd [#allocation6], %s29
      %s31 = sshll.u32 [#allocation5], 4
      %s32 = int_to_ptr.vmem [resolvable:$true] %s31
      %37 = dma.hbm_to_vmem [thread:$0]  %s1, 1536, %s32, [#allocation6], 384, 384, 24
    $region9: #{tpu_custom_call.1} parent=1 // pred_fallthru
      _
    // Predicated region
    $region10: #{tpu_custom_call.1} parent=1 // pred_check
      _
    $region11: #{tpu_custom_call.1} parent=1 // pred_check_branch
      %39 = sbr.rel (0) target = $region13
    $region12: #{tpu_custom_call.1} parent=1 // pred_region
      _
    $region13: #{tpu_custom_call.1} parent=1 // pred_fallthru
      _
    // Predicated region
    $region14: #{tpu_custom_call.1} parent=1 // pred_check
      _
    $region15: #{tpu_custom_call.1} parent=1 // pred_check_branch
      %41 = sbr.rel (0) target = $region17
    $region16: #{tpu_custom_call.1} parent=1 // pred_region
      %42 = dma.done [#allocation3], 256
    $region17: #{tpu_custom_call.1} parent=1 // pred_fallthru
      _
    // Predicated region
    $region18: #{tpu_custom_call.1} parent=1 // pred_check
      _
    $region19: #{tpu_custom_call.1} parent=1 // pred_check_branch
      %44 = sbr.rel (0) target = $region21
    $region20: #{tpu_custom_call.1} parent=1 // pred_region
      %45 = dma.done [#allocation6], 1536
    $region21: #{tpu_custom_call.1} parent=1 // pred_fallthru
      _
    %v46 = vld [vmem:[#allocation2] sm:$0xff]
    %v47 = vld [vmem:[#allocation2 + $0x8] sm:$0xff]
    %v48 = vld [vmem:[#allocation5] sm:$0xff]
    %v49 = vld [vmem:[#allocation5 + $0x8] sm:$0xff]
    %v50 = vld [vmem:[#allocation5 + $0x10] sm:$0xff]
    %v51 = vld [vmem:[#allocation5 + $0x18] sm:$0xff]
    %v52 = vld [vmem:[#allocation5 + $0x20] sm:$0xff]
    %v53 = vld [vmem:[#allocation5 + $0x28] sm:$0xff]
    %v54 = vld [vmem:[#allocation5 + $0x30] sm:$0xff]
    %v55 = vld [vmem:[#allocation5 + $0x38] sm:$0xff]
    %v56 = vld [vmem:[#allocation5 + $0x40] sm:$0xff]
    %v57 = vld [vmem:[#allocation5 + $0x48] sm:$0xff]
    %v58 = vld [vmem:[#allocation5 + $0x50] sm:$0xff]
    %v59 = vld [vmem:[#allocation5 + $0x58] sm:$0xff]
    %v60 = vld [vmem:[%s2] sm:$0x7]
    %v62 = vlaneseq
    %v63 = vshrl.u32 %v62, 7
    %v64 = vsub.s32 0, %v63
    %v65 = vrot.slane %v60, %v64
    %v66 = vlaneseq
    %v67 = vshrl.u32 %v66, 7
    %v68 = vsub.s32 1, %v67
    %v69 = vrot.slane %v60, %v68
    %v70 = vlaneseq
    %v71 = vshrl.u32 %v70, 7
    %v72 = vsub.s32 2, %v71
    %v73 = vrot.slane %v60, %v72
    %vm77 = vcmask 261120
    %v79 = vsel %vm77, %v46, 0
    %v82 = vsel %vm77, %v47, 0
    %84 = vmatprep.subr.mxu0 %v49
    %85 = vmatpush1.msra.mxu0 %v48
    %86 = vmatprep.subr.mxu0 %v52
    %87 = vmatpush1.msra.mxu0 %v51
    %88 = vmatprep.subr.mxu0 %v55
    %89 = vmatpush1.msra.mxu0 %v54
    %90 = vmatprep.subr.mxu0 %v58
    %91 = vmatpush1.msra.mxu0 %v57
    %92 = vmatprep.subr.mxu0 0.0
    %93 = vmatpush1.msra.mxu0 0.0
    %94 = vmatprep.subr.mxu0 0.0
    %95 = vmatpush1.msra.mxu0 0.0
    %96 = vmatprep.subr.mxu0 0.0
    %97 = vmatpush1.msra.mxu0 0.0
    %98 = vmatprep.subr.mxu0 0.0
    %99 = vmatpush1.msra.mxu0 0.0
    %100 = vmatprep.subr.mxu0 0.0
    %101 = vmatpush1.msra.mxu0 0.0
    %102 = vmatprep.subr.mxu0 0.0
    %103 = vmatpush1.msra.mxu0 0.0
    %104 = vmatprep.subr.mxu0 0.0
    %105 = vmatpush1.msra.mxu0 0.0
    %106 = vmatprep.subr.mxu0 0.0
    %107 = vmatpush1.msra.mxu0 0.0
    %108 = vmatprep.subr.mxu0 0.0
    %109 = vmatpush1.msra.mxu0 0.0
    %110 = vmatprep.subr.mxu0 0.0
    %111 = vmatpush1.msra.mxu0 0.0
    %112 = vmatprep.subr.mxu0 0.0
    %113 = vmatpush1.msra.mxu0 0.0
    %114 = vmatprep.subr.mxu0 0.0
    %115 = vmatpush1.msra.mxu0 0.0
    %116 = vmatprep.subr.mxu0 0.0
    %117 = vmatpush1.msra.mxu0 0.0
    %118 = vmatprep.subr.mxu0 0.0
    %119 = vmatpush1.msra.mxu0 0.0
    %120 = vmatprep.subr.mxu0 0.0
    %121 = vmatpush1.msra.mxu0 0.0
    %122 = vmatprep.subr.mxu0 0.0
    %123 = vmatpush1.msra.mxu0 0.0
    %124 = vmatprep.subr.mxu0 0.0
    %125 = vmatpush1.msra.mxu0 0.0
    %126 = vmatprep.subr.mxu0 0.0
    %127 = vmatpush1.msra.mxu0 0.0
    %128 = vmatprep.subr.mxu0 0.0
    %129 = vmatpush1.msra.mxu0 0.0
    %130 = vmatprep.subr.mxu0 0.0
    %131 = vmatpush1.msra.mxu0 0.0
    %132 = vmatprep.subr.mxu0 0.0
    %133 = vmatpush1.msra.mxu0 0.0
    %134 = vmatprep.subr.mxu0 0.0
    %135 = vmatpush1.msra.mxu0 0.0
    %136 = vmatprep.subr.mxu0 0.0
    %137 = vmatpush1.msra.mxu0 0.0
    %138 = vmatprep.subr.mxu0 0.0
    %139 = vmatpush1.msra.mxu0 0.0
    %140 = vmatprep.subr.mxu0 0.0
    %141 = vmatpush1.msra.mxu0 0.0
    %142 = vmatprep.subr.mxu0 0.0
    %143 = vmatpush1.msra.mxu0 0.0
    %144 = vmatprep.subr.mxu0 0.0
    %145 = vmatpush1.msra.mxu0 0.0
    %146 = vmatprep.subr.mxu0 0.0
    %147 = vmatpush1.msra.mxu0 0.0
    %148 = vmatprep.mubr.f32.mxu0 0.0
    %149 = vmatmul.mubr.f32.gmra.mrb[0].mxu0 %v79
    %v150 = vpop.f32.mrb[0].mxu0
    %v151 = vadd.f32 %v65, %v150
    %v152 = vpop.f32.mrb[0].mxu0
    %v153 = vadd.f32 %v69, %v152
    %154 = vmatprep.mubr.f32.mxu0 0.0
    %155 = vmatmul.mubr.f32.gmra.mrb[0].mxu0 %v82
    %v156 = vpop.f32.mrb[0].mxu0
    %v157 = vadd.f32 %v65, %v156
    %v158 = vpop.f32.mrb[0].mxu0
    %v159 = vadd.f32 %v69, %v158
    %160 = vdwg.mxu0
    %161 = vmatprep.subr.mxu0 0.0
    %162 = vmatpush1.msra.mxu0 %v50
    %163 = vmatprep.subr.mxu0 0.0
    %164 = vmatpush1.msra.mxu0 %v53
    %165 = vmatprep.subr.mxu0 0.0
    %166 = vmatpush1.msra.mxu0 %v56
    %167 = vmatprep.subr.mxu0 0.0
    %168 = vmatpush1.msra.mxu0 %v59
    %169 = vmatprep.subr.mxu0 0.0
    %170 = vmatpush1.msra.mxu0 0.0
    %171 = vmatprep.subr.mxu0 0.0
    %172 = vmatpush1.msra.mxu0 0.0
    %173 = vmatprep.subr.mxu0 0.0
    %174 = vmatpush1.msra.mxu0 0.0
    %175 = vmatprep.subr.mxu0 0.0
    %176 = vmatpush1.msra.mxu0 0.0
    %177 = vmatprep.subr.mxu0 0.0
    %178 = vmatpush1.msra.mxu0 0.0
    %179 = vmatprep.subr.mxu0 0.0
    %180 = vmatpush1.msra.mxu0 0.0
    %181 = vmatprep.subr.mxu0 0.0
    %182 = vmatpush1.msra.mxu0 0.0
    %183 = vmatprep.subr.mxu0 0.0
    %184 = vmatpush1.msra.mxu0 0.0
    %185 = vmatprep.subr.mxu0 0.0
    %186 = vmatpush1.msra.mxu0 0.0
    %187 = vmatprep.subr.mxu0 0.0
    %188 = vmatpush1.msra.mxu0 0.0
    %189 = vmatprep.subr.mxu0 0.0
    %190 = vmatpush1.msra.mxu0 0.0
    %191 = vmatprep.subr.mxu0 0.0
    %192 = vmatpush1.msra.mxu0 0.0
    %193 = vmatprep.subr.mxu0 0.0
    %194 = vmatpush1.msra.mxu0 0.0
    %195 = vmatprep.subr.mxu0 0.0
    %196 = vmatpush1.msra.mxu0 0.0
    %197 = vmatprep.subr.mxu0 0.0
    %198 = vmatpush1.msra.mxu0 0.0
    %199 = vmatprep.subr.mxu0 0.0
    %200 = vmatpush1.msra.mxu0 0.0
    %201 = vmatprep.subr.mxu0 0.0
    %202 = vmatpush1.msra.mxu0 0.0
    %203 = vmatprep.subr.mxu0 0.0
    %204 = vmatpush1.msra.mxu0 0.0
    %205 = vmatprep.subr.mxu0 0.0
    %206 = vmatpush1.msra.mxu0 0.0
    %207 = vmatprep.subr.mxu0 0.0
    %208 = vmatpush1.msra.mxu0 0.0
    %209 = vmatprep.subr.mxu0 0.0
    %210 = vmatpush1.msra.mxu0 0.0
    %211 = vmatprep.subr.mxu0 0.0
    %212 = vmatpush1.msra.mxu0 0.0
    %213 = vmatprep.subr.mxu0 0.0
    %214 = vmatpush1.msra.mxu0 0.0
    %215 = vmatprep.subr.mxu0 0.0
    %216 = vmatpush1.msra.mxu0 0.0
    %217 = vmatprep.subr.mxu0 0.0
    %218 = vmatpush1.msra.mxu0 0.0
    %219 = vmatprep.subr.mxu0 0.0
    %220 = vmatpush1.msra.mxu0 0.0
    %221 = vmatprep.subr.mxu0 0.0
    %222 = vmatpush1.msra.mxu0 0.0
    %223 = vmatprep.subr.mxu0 0.0
    %224 = vmatpush1.msra.mxu0 0.0
    %225 = vmatprep.mubr.f32.mxu0 0.0
    %226 = vmatmul.mubr.f32.gmra.mrb[0].mxu0 %v79
    %v227 = vpop.f32.mrb[0].mxu0
    %v228 = vadd.f32 %v73, %v227
    %v229 = vpop.f32.mrb[0].mxu0
    %230 = vmatprep.mubr.f32.mxu0 0.0
    %231 = vmatmul.mubr.f32.gmra.mrb[0].mxu0 %v82
    %v232 = vpop.f32.mrb[0].mxu0
    %v233 = vadd.f32 %v73, %v232
    %v234 = vpop.f32.mrb[0].mxu0
    %235 = vdwg.mxu0
    %v237 = vsel %vm77, %v151, 0
    %v240 = vsel %vm77, %v153, 0
    %242 = vmatprep.subr.mxu0 0.0
    %243 = vmatpush1.xpose.msra.mxu0 %v240
    %244 = vmatprep.subr.mxu0 0.0
    %245 = vmatpush1.xpose.msra.mxu0 0.0
    %246 = vmatprep.subr.mxu0 0.0
    %247 = vmatpush1.xpose.msra.mxu0 0.0
    %248 = vmatprep.subr.mxu0 0.0
    %249 = vmatpush1.xpose.msra.mxu0 0.0
    %250 = vmatprep.subr.mxu0 0.0
    %251 = vmatpush1.xpose.msra.mxu0 0.0
    %252 = vmatprep.subr.mxu0 0.0
    %253 = vmatpush1.xpose.msra.mxu0 0.0
    %254 = vmatprep.subr.mxu0 0.0
    %255 = vmatpush1.xpose.msra.mxu0 0.0
    %256 = vmatprep.subr.mxu0 0.0
    %257 = vmatpush1.xpose.msra.mxu0 0.0
    %258 = vmatprep.subr.mxu0 0.0
    %259 = vmatpush1.xpose.msra.mxu0 0.0
    %260 = vmatprep.subr.mxu0 0.0
    %261 = vmatpush1.xpose.msra.mxu0 0.0
    %262 = vmatprep.subr.mxu0 0.0
    %263 = vmatpush1.xpose.msra.mxu0 0.0
    %264 = vmatprep.subr.mxu0 0.0
    %265 = vmatpush1.xpose.msra.mxu0 0.0
    %266 = vmatprep.subr.mxu0 0.0
    %267 = vmatpush1.xpose.msra.mxu0 0.0
    %268 = vmatprep.subr.mxu0 0.0
    %269 = vmatpush1.xpose.msra.mxu0 0.0
    %270 = vmatprep.subr.mxu0 0.0
    %271 = vmatpush1.xpose.msra.mxu0 0.0
    %272 = vmatprep.subr.mxu0 0.0
    %273 = vmatpush1.xpose.msra.mxu0 0.0
    %274 = vmatprep.subr.mxu0 0.0
    %275 = vmatpush1.xpose.msra.mxu0 0.0
    %276 = vmatprep.subr.mxu0 0.0
    %277 = vmatpush1.xpose.msra.mxu0 0.0
    %278 = vmatprep.subr.mxu0 0.0
    %279 = vmatpush1.xpose.msra.mxu0 0.0
    %280 = vmatprep.subr.mxu0 0.0
    %281 = vmatpush1.xpose.msra.mxu0 0.0
    %282 = vmatprep.subr.mxu0 0.0
    %283 = vmatpush1.xpose.msra.mxu0 0.0
    %284 = vmatprep.subr.mxu0 0.0
    %285 = vmatpush1.xpose.msra.mxu0 0.0
    %286 = vmatprep.subr.mxu0 0.0
    %287 = vmatpush1.xpose.msra.mxu0 0.0
    %288 = vmatprep.subr.mxu0 0.0
    %289 = vmatpush1.xpose.msra.mxu0 0.0
    %290 = vmatprep.subr.mxu0 0.0
    %291 = vmatpush1.xpose.msra.mxu0 0.0
    %292 = vmatprep.subr.mxu0 0.0
    %293 = vmatpush1.xpose.msra.mxu0 0.0
    %294 = vmatprep.subr.mxu0 0.0
    %295 = vmatpush1.xpose.msra.mxu0 0.0
    %296 = vmatprep.subr.mxu0 0.0
    %297 = vmatpush1.xpose.msra.mxu0 0.0
    %298 = vmatprep.subr.mxu0 0.0
    %299 = vmatpush1.xpose.msra.mxu0 0.0
    %300 = vmatprep.subr.mxu0 0.0
    %301 = vmatpush1.xpose.msra.mxu0 0.0
    %302 = vmatprep.subr.mxu0 0.0
    %303 = vmatpush1.xpose.msra.mxu0 0.0
    %304 = vmatprep.subr.mxu0 0.0
    %305 = vmatpush1.xpose.msra.mxu0 0.0
    %306 = vmatprep.mubr.f32.mxu0 0.0
    %307 = vmatmul.mubr.f32.gmra.mrb[0].mxu0 %v237
    %v308 = vpop.f32.mrb[0].mxu0
    %v309 = vadd.f32 0.0, %v308
    %v310 = vpop.f32.mrb[0].mxu0
    %311 = vdwg.mxu0
    %v313 = vsel %vm77, %v157, 0
    %v316 = vsel %vm77, %v159, 0
    %318 = vmatprep.subr.mxu0 0.0
    %319 = vmatpush1.xpose.msra.mxu0 %v316
    %320 = vmatprep.subr.mxu0 0.0
    %321 = vmatpush1.xpose.msra.mxu0 0.0
    %322 = vmatprep.subr.mxu0 0.0
    %323 = vmatpush1.xpose.msra.mxu0 0.0
    %324 = vmatprep.subr.mxu0 0.0
    %325 = vmatpush1.xpose.msra.mxu0 0.0
    %326 = vmatprep.subr.mxu0 0.0
    %327 = vmatpush1.xpose.msra.mxu0 0.0
    %328 = vmatprep.subr.mxu0 0.0
    %329 = vmatpush1.xpose.msra.mxu0 0.0
    %330 = vmatprep.subr.mxu0 0.0
    %331 = vmatpush1.xpose.msra.mxu0 0.0
    %332 = vmatprep.subr.mxu0 0.0
    %333 = vmatpush1.xpose.msra.mxu0 0.0
    %334 = vmatprep.subr.mxu0 0.0
    %335 = vmatpush1.xpose.msra.mxu0 0.0
    %336 = vmatprep.subr.mxu0 0.0
    %337 = vmatpush1.xpose.msra.mxu0 0.0
    %338 = vmatprep.subr.mxu0 0.0
    %339 = vmatpush1.xpose.msra.mxu0 0.0
    %340 = vmatprep.subr.mxu0 0.0
    %341 = vmatpush1.xpose.msra.mxu0 0.0
    %342 = vmatprep.subr.mxu0 0.0
    %343 = vmatpush1.xpose.msra.mxu0 0.0
    %344 = vmatprep.subr.mxu0 0.0
    %345 = vmatpush1.xpose.msra.mxu0 0.0
    %346 = vmatprep.subr.mxu0 0.0
    %347 = vmatpush1.xpose.msra.mxu0 0.0
    %348 = vmatprep.subr.mxu0 0.0
    %349 = vmatpush1.xpose.msra.mxu0 0.0
    %350 = vmatprep.subr.mxu0 0.0
    %351 = vmatpush1.xpose.msra.mxu0 0.0
    %352 = vmatprep.subr.mxu0 0.0
    %353 = vmatpush1.xpose.msra.mxu0 0.0
    %354 = vmatprep.subr.mxu0 0.0
    %355 = vmatpush1.xpose.msra.mxu0 0.0
    %356 = vmatprep.subr.mxu0 0.0
    %357 = vmatpush1.xpose.msra.mxu0 0.0
    %358 = vmatprep.subr.mxu0 0.0
    %359 = vmatpush1.xpose.msra.mxu0 0.0
    %360 = vmatprep.subr.mxu0 0.0
    %361 = vmatpush1.xpose.msra.mxu0 0.0
    %362 = vmatprep.subr.mxu0 0.0
    %363 = vmatpush1.xpose.msra.mxu0 0.0
    %364 = vmatprep.subr.mxu0 0.0
    %365 = vmatpush1.xpose.msra.mxu0 0.0
    %366 = vmatprep.subr.mxu0 0.0
    %367 = vmatpush1.xpose.msra.mxu0 0.0
    %368 = vmatprep.subr.mxu0 0.0
    %369 = vmatpush1.xpose.msra.mxu0 0.0
    %370 = vmatprep.subr.mxu0 0.0
    %371 = vmatpush1.xpose.msra.mxu0 0.0
    %372 = vmatprep.subr.mxu0 0.0
    %373 = vmatpush1.xpose.msra.mxu0 0.0
    %374 = vmatprep.subr.mxu0 0.0
    %375 = vmatpush1.xpose.msra.mxu0 0.0
    %376 = vmatprep.subr.mxu0 0.0
    %377 = vmatpush1.xpose.msra.mxu0 0.0
    %378 = vmatprep.subr.mxu0 0.0
    %379 = vmatpush1.xpose.msra.mxu0 0.0
    %380 = vmatprep.subr.mxu0 0.0
    %381 = vmatpush1.xpose.msra.mxu0 0.0
    %382 = vmatprep.mubr.f32.mxu0 0.0
    %383 = vmatmul.mubr.f32.gmra.mrb[0].mxu0 %v313
    %v384 = vpop.f32.mrb[0].mxu0
    %v385 = vadd.f32 0.0, %v384
    %v386 = vpop.f32.mrb[0].mxu0
    %387 = vdwg.mxu0
    %v388 = vmul.f32 %v309, 0.17677669
    %v389 = vmul.f32 %v385, 0.17677669
    %vm390 = vcmask 64512
    %v391 = vsel %vm390, %v388, -inf
    %392 = vmax.xlane.f32.xlu0 %v391
    %v393 = vpop.xlane.xlu0 %392
    %v394 = vsel %vm390, %v389, -inf
    %395 = vmax.xlane.f32.xlu0 %v394
    %v396 = vpop.xlane.xlu0 %395
    %v397 = vsub.f32 %v388, %v393
    %v398 = vsub.f32 %v389, %v396
    %v399 = vmul.f32 %v397, 1.442695
    %v400 = vpow.pop %v399
    %v401 = vmul.f32 %v398, 1.442695
    %v402 = vpow.pop %v401
    %v403 = vsel %vm390, %v400, 0.0
    %404 = vadd.xlane.f32.xlu0 %v403
    %v405 = vpop.xlane.xlu0 %404
    %v406 = vsel %vm390, %v402, 0.0
    %407 = vadd.xlane.f32.xlu0 %v406
    %v408 = vpop.xlane.xlu0 %407
    %v409 = vrcp.pop %v405
    %v410 = vrcp.pop %v408
    %v411 = vmul.f32 %v405, %v409
    %v412 = vmul.f32 %v408, %v410
    %v413 = vsub.f32 2.0, %v411
    %v414 = vsub.f32 2.0, %v412
    %v415 = vmul.f32 %v409, %v413
    %v416 = vmul.f32 %v410, %v414
    %v417 = vmul.f32 %v400, %v415
    %v418 = vmul.f32 %v402, %v416
    %v420 = vsel %vm390, %v417, 0
    %422 = vmatprep.subr.mxu0 0.0
    %423 = vmatpush1.msra.mxu0 %v228
    %424 = vmatprep.subr.mxu0 0.0
    %425 = vmatpush1.msra.mxu0 0.0
    %426 = vmatprep.subr.mxu0 0.0
    %427 = vmatpush1.msra.mxu0 0.0
    %428 = vmatprep.subr.mxu0 0.0
    %429 = vmatpush1.msra.mxu0 0.0
    %430 = vmatprep.subr.mxu0 0.0
    %431 = vmatpush1.msra.mxu0 0.0
    %432 = vmatprep.subr.mxu0 0.0
    %433 = vmatpush1.msra.mxu0 0.0
    %434 = vmatprep.subr.mxu0 0.0
    %435 = vmatpush1.msra.mxu0 0.0
    %436 = vmatprep.subr.mxu0 0.0
    %437 = vmatpush1.msra.mxu0 0.0
    %438 = vmatprep.subr.mxu0 0.0
    %439 = vmatpush1.msra.mxu0 0.0
    %440 = vmatprep.subr.mxu0 0.0
    %441 = vmatpush1.msra.mxu0 0.0
    %442 = vmatprep.subr.mxu0 0.0
    %443 = vmatpush1.msra.mxu0 0.0
    %444 = vmatprep.subr.mxu0 0.0
    %445 = vmatpush1.msra.mxu0 0.0
    %446 = vmatprep.subr.mxu0 0.0
    %447 = vmatpush1.msra.mxu0 0.0
    %448 = vmatprep.subr.mxu0 0.0
    %449 = vmatpush1.msra.mxu0 0.0
    %450 = vmatprep.subr.mxu0 0.0
    %451 = vmatpush1.msra.mxu0 0.0
    %452 = vmatprep.subr.mxu0 0.0
    %453 = vmatpush1.msra.mxu0 0.0
    %454 = vmatprep.subr.mxu0 0.0
    %455 = vmatpush1.msra.mxu0 0.0
    %456 = vmatprep.subr.mxu0 0.0
    %457 = vmatpush1.msra.mxu0 0.0
    %458 = vmatprep.subr.mxu0 0.0
    %459 = vmatpush1.msra.mxu0 0.0
    %460 = vmatprep.subr.mxu0 0.0
    %461 = vmatpush1.msra.mxu0 0.0
    %462 = vmatprep.subr.mxu0 0.0
    %463 = vmatpush1.msra.mxu0 0.0
    %464 = vmatprep.subr.mxu0 0.0
    %465 = vmatpush1.msra.mxu0 0.0
    %466 = vmatprep.subr.mxu0 0.0
    %467 = vmatpush1.msra.mxu0 0.0
    %468 = vmatprep.subr.mxu0 0.0
    %469 = vmatpush1.msra.mxu0 0.0
    %470 = vmatprep.subr.mxu0 0.0
    %471 = vmatpush1.msra.mxu0 0.0
    %472 = vmatprep.subr.mxu0 0.0
    %473 = vmatpush1.msra.mxu0 0.0
    %474 = vmatprep.subr.mxu0 0.0
    %475 = vmatpush1.msra.mxu0 0.0
    %476 = vmatprep.subr.mxu0 0.0
    %477 = vmatpush1.msra.mxu0 0.0
    %478 = vmatprep.subr.mxu0 0.0
    %479 = vmatpush1.msra.mxu0 0.0
    %480 = vmatprep.subr.mxu0 0.0
    %481 = vmatpush1.msra.mxu0 0.0
    %482 = vmatprep.subr.mxu0 0.0
    %483 = vmatpush1.msra.mxu0 0.0
    %484 = vmatprep.subr.mxu0 0.0
    %485 = vmatpush1.msra.mxu0 0.0
    %486 = vmatprep.mubr.f32.mxu0 0.0
    %487 = vmatmul.mubr.f32.gmra.mrb[0].mxu0 %v420
    %v488 = vpop.f32.mrb[0].mxu0
    %v489 = vadd.f32 0.0, %v488
    %v490 = vpop.f32.mrb[0].mxu0
    %491 = vdwg.mxu0
    %v493 = vsel %vm390, %v418, 0
    %495 = vmatprep.subr.mxu0 0.0
    %496 = vmatpush1.msra.mxu0 %v233
    %497 = vmatprep.subr.mxu0 0.0
    %498 = vmatpush1.msra.mxu0 0.0
    %499 = vmatprep.subr.mxu0 0.0
    %500 = vmatpush1.msra.mxu0 0.0
    %501 = vmatprep.subr.mxu0 0.0
    %502 = vmatpush1.msra.mxu0 0.0
    %503 = vmatprep.subr.mxu0 0.0
    %504 = vmatpush1.msra.mxu0 0.0
    %505 = vmatprep.subr.mxu0 0.0
    %506 = vmatpush1.msra.mxu0 0.0
    %507 = vmatprep.subr.mxu0 0.0
    %508 = vmatpush1.msra.mxu0 0.0
    %509 = vmatprep.subr.mxu0 0.0
    %510 = vmatpush1.msra.mxu0 0.0
    %511 = vmatprep.subr.mxu0 0.0
    %512 = vmatpush1.msra.mxu0 0.0
    %513 = vmatprep.subr.mxu0 0.0
    %514 = vmatpush1.msra.mxu0 0.0
    %515 = vmatprep.subr.mxu0 0.0
    %516 = vmatpush1.msra.mxu0 0.0
    %517 = vmatprep.subr.mxu0 0.0
    %518 = vmatpush1.msra.mxu0 0.0
    %519 = vmatprep.subr.mxu0 0.0
    %520 = vmatpush1.msra.mxu0 0.0
    %521 = vmatprep.subr.mxu0 0.0
    %522 = vmatpush1.msra.mxu0 0.0
    %523 = vmatprep.subr.mxu0 0.0
    %524 = vmatpush1.msra.mxu0 0.0
    %525 = vmatprep.subr.mxu0 0.0
    %526 = vmatpush1.msra.mxu0 0.0
    %527 = vmatprep.subr.mxu0 0.0
    %528 = vmatpush1.msra.mxu0 0.0
    %529 = vmatprep.subr.mxu0 0.0
    %530 = vmatpush1.msra.mxu0 0.0
    %531 = vmatprep.subr.mxu0 0.0
    %532 = vmatpush1.msra.mxu0 0.0
    %533 = vmatprep.subr.mxu0 0.0
    %534 = vmatpush1.msra.mxu0 0.0
    %535 = vmatprep.subr.mxu0 0.0
    %536 = vmatpush1.msra.mxu0 0.0
    %537 = vmatprep.subr.mxu0 0.0
    %538 = vmatpush1.msra.mxu0 0.0
    %539 = vmatprep.subr.mxu0 0.0
    %540 = vmatpush1.msra.mxu0 0.0
    %541 = vmatprep.subr.mxu0 0.0
    %542 = vmatpush1.msra.mxu0 0.0
    %543 = vmatprep.subr.mxu0 0.0
    %544 = vmatpush1.msra.mxu0 0.0
    %545 = vmatprep.subr.mxu0 0.0
    %546 = vmatpush1.msra.mxu0 0.0
    %547 = vmatprep.subr.mxu0 0.0
    %548 = vmatpush1.msra.mxu0 0.0
    %549 = vmatprep.subr.mxu0 0.0
    %550 = vmatpush1.msra.mxu0 0.0
    %551 = vmatprep.subr.mxu0 0.0
    %552 = vmatpush1.msra.mxu0 0.0
    %553 = vmatprep.subr.mxu0 0.0
    %554 = vmatpush1.msra.mxu0 0.0
    %555 = vmatprep.subr.mxu0 0.0
    %556 = vmatpush1.msra.mxu0 0.0
    %557 = vmatprep.subr.mxu0 0.0
    %558 = vmatpush1.msra.mxu0 0.0
    %559 = vmatprep.mubr.f32.mxu0 0.0
    %560 = vmatmul.mubr.f32.gmra.mrb[0].mxu0 %v493
    %v561 = vpop.f32.mrb[0].mxu0
    %v562 = vadd.f32 0.0, %v561
    %v563 = vpop.f32.mrb[0].mxu0
    %564 = vdwg.mxu0
    %565 = vst.msk [vmem:[#allocation7] sm:$0xff] %vm77, %v489
    %566 = vst.msk [vmem:[#allocation7 + $0x8] sm:$0xff] %vm77, %v562
    %567 = vst.msk [vmem:[#allocation8] sm:$0xff] %vm390, %v417
    %568 = vst.msk [vmem:[#allocation8 + $0x8] sm:$0xff] %vm390, %v418
    // Predicated region
    $region22: #{tpu_custom_call.1} parent=1 // pred_check
      _
    $region23: #{tpu_custom_call.1} parent=1 // pred_check_branch
      %570 = sbr.rel (0) target = $region25
    $region24: #{tpu_custom_call.1} parent=1 // pred_region
      %s572 = ssub.s32 256, 256
      %573 = vsyncadd [#allocation4], %s572
      %s574 = sshll.u32 [#allocation7], 4
      %s575 = int_to_ptr.vmem [resolvable:$true] %s574
      %580 = dma.vmem_to_hbm [thread:$0]  %s575, 256, %s3, [#allocation4], 128, 128, 8
    $region25: #{tpu_custom_call.1} parent=1 // pred_fallthru
      _
    // Predicated region
    $region26: #{tpu_custom_call.1} parent=1 // pred_check
      _
    $region27: #{tpu_custom_call.1} parent=1 // pred_check_branch
      %582 = sbr.rel (0) target = $region29
    $region28: #{tpu_custom_call.1} parent=1 // pred_region
      %s584 = ssub.s32 256, 256
      %585 = vsyncadd [#allocation9], %s584
      %s586 = sshll.u32 [#allocation8], 4
      %s587 = int_to_ptr.vmem [resolvable:$true] %s586
      %592 = dma.vmem_to_hbm [thread:$0]  %s587, 256, %s4, [#allocation9], 128, 128, 8
    $region29: #{tpu_custom_call.1} parent=1 // pred_fallthru
      _
    // Predicated region
    $region30: #{tpu_custom_call.1} parent=1 // pred_check
      _
    $region31: #{tpu_custom_call.1} parent=1 // pred_check_branch
      %594 = sbr.rel (0) target = $region33
    $region32: #{tpu_custom_call.1} parent=1 // pred_region
      %595 = dma.done [#allocation4], 256
    $region33: #{tpu_custom_call.1} parent=1 // pred_fallthru
      _
    // Predicated region
    $region34: #{tpu_custom_call.1} parent=1 // pred_check
      _
    $region35: #{tpu_custom_call.1} parent=1 // pred_check_branch
      %597 = sbr.rel (0) target = $region37
    $region36: #{tpu_custom_call.1} parent=1 // pred_region
      %598 = dma.done [#allocation9], 256
    $region37: #{tpu_custom_call.1} parent=1 // pred_fallthru
      _
    %599 = vsyncpa [#allocation3], 1
    %600 = vsyncpa [#allocation6], 1
    %601 = vsyncpa [#allocation4], 1
    %602 = vsyncpa [#allocation9], 1

</llo_original>
